<compile_context>
chip_gen: v6e
topology: v6e:2x2x1
jax: 0.10.0
libtpu: 0.0.40
codegen_flags: <defaults>
</compile_context>

<pallas_src>
import functools
import math

import jax
import jax.numpy as jnp
from jax.experimental import pallas as pl
from jax.experimental.pallas import tpu as pltpu

LANE = 128
C0 = 96       # conv0 out channels
C1 = 256      # conv1 out channels
FC1 = 10
FC2 = 2
K1 = 3        # conv1 kernel size
S1 = 2        # conv1 stride


def _rup(x, m):
    return (x + m - 1) // m * m


def _leaky(x, slope=0.01):
    return jnp.where(x > 0, x, slope * x)


# ----------------------------------------------------------------------------
# Fused forward kernel: one image per grid step; everything stays in VMEM.
# ----------------------------------------------------------------------------
def fused_forward_kernel(p0_ref, w0_ref, b0_ref, w1_ref, b1_ref,
                         fw1_ref, fb1_ref, fw2_ref, fb2_ref, o_ref,
                         *, wo0, hp0, wp0, ho1, wo1, hp1, wp1):
    # ---- conv0 as a single deep-K im2col matmul (+bias, leaky) ---------------
    # p0_ref: (ho0*wo0, K0p)   w0_ref: (K0p, 128)   -> (ho0*wo0, 128)
    h0 = jnp.dot(p0_ref[...], w0_ref[...], preferred_element_type=jnp.float32)
    h0 = _leaky(h0 + b0_ref[...])

    # ---- MaxPool2d(2) (floor) over the row-major (ho0, wo0) spatial grid -----
    pooled = []                                     # hp0*wp0 rows of (1, 128)
    for pi in range(hp0):
        top = h0[(2 * pi) * wo0:(2 * pi) * wo0 + wo0, :]
        bot = h0[(2 * pi + 1) * wo0:(2 * pi + 1) * wo0 + wo0, :]
        vmax = jnp.maximum(top, bot)                # (wo0, 128)
        for pj in range(wp0):
            pooled.append(jnp.maximum(vmax[2 * pj:2 * pj + 1, :],
                                      vmax[2 * pj + 1:2 * pj + 2, :]))

    # ---- conv1 im2col: (ho1*wo1, K1*K1*128) built from pooled rows -----------
    rows = []
    for oi in range(ho1):
        for oj in range(wo1):
            taps = [pooled[(S1 * oi + ki) * wp0 + (S1 * oj + kj)]
                    for ki in range(K1) for kj in range(K1)]
            rows.append(jnp.concatenate(taps, axis=1))   # (1, K1*K1*128)
    p1 = jnp.concatenate(rows, axis=0)                   # (ho1*wo1, K1*K1*128)

    h1 = jnp.dot(p1, w1_ref[...], preferred_element_type=jnp.float32)
    h1 = _leaky(h1 + b1_ref[...])                        # (ho1*wo1, 256)

    # ---- MaxPool2d(2) (floor) over (ho1, wo1) + flatten (NHWC order) ---------
    cells = []
    for pi in range(hp1):
        for pj in range(wp1):
            r0 = (2 * pi) * wo1 + 2 * pj
            r1 = (2 * pi + 1) * wo1 + 2 * pj
            m = jnp.maximum(jnp.maximum(h1[r0:r0 + 1, :], h1[r0 + 1:r0 + 2, :]),
                            jnp.maximum(h1[r1:r1 + 1, :], h1[r1 + 1:r1 + 2, :]))
            cells.append(m)
    flat = cells[0] if len(cells) == 1 else jnp.concatenate(cells, axis=1)
    # (1, hp1*wp1*256); fc1 rows were pre-permuted to this order in the wrapper.

    # ---- fc1 + leaky + fc2 (output channels zero-padded to 128) --------------
    h2 = _leaky(jnp.dot(flat, fw1_ref[...], preferred_element_type=jnp.float32)
                + fb1_ref[...])                          # (1, 128)
    out = jnp.dot(h2, fw2_ref[...], preferred_element_type=jnp.float32) + fb2_ref[...]
    o_ref[...] = out.astype(o_ref.dtype)                 # (1, 128)


# ----------------------------------------------------------------------------
# Wrapper: layout prep (im2col, lane padding, weight packing) + one pallas_call.
# ----------------------------------------------------------------------------
def one_conv_forward(x_nchw, p, kernel_size):
    N, cin, H, W = x_nchw.shape
    x = jnp.transpose(x_nchw, (0, 2, 3, 1)).astype(jnp.float32)   # NHWC

    # static pipeline geometry
    ho0 = (H - kernel_size) // 2 + 1
    wo0 = (W - kernel_size) // 2 + 1
    hp0, wp0 = ho0 // 2, wo0 // 2
    ho1 = (hp0 - K1) // S1 + 1
    wo1 = (wp0 - K1) // S1 + 1
    hp1, wp1 = ho1 // 2, wo1 // 2
    fc_in = hp1 * wp1 * C1

    # ---- conv0 im2col in the wrapper (stride-2 gather kept out of the kernel) --
    taps = []
    for i in range(kernel_size):
        for j in range(kernel_size):
            taps.append(jax.lax.slice(
                x, (0, i, j, 0),
                (N, i + (ho0 - 1) * 2 + 1, j + (wo0 - 1) * 2 + 1, cin),
                (1, 2, 2, 1)))
    patches = jnp.concatenate(taps, axis=-1)              # (N, ho0, wo0, k*k*cin)
    k0 = kernel_size * kernel_size * cin
    patches = patches.reshape(N, ho0 * wo0, k0)
    k0p = _rup(k0, LANE)
    patches = jnp.pad(patches, ((0, 0), (0, 0), (0, k0p - k0)))

    # ---- pack / zero-pad weights into lane-dense matmul layouts ----------------
    c0p = _rup(C0, LANE)                                                   # 128
    w0col = jnp.pad(p["w0"].reshape(k0, C0), ((0, k0p - k0), (0, c0p - C0)))
    b0 = jnp.pad(p["b0"].reshape(1, C0), ((0, 0), (0, c0p - C0)))

    w1col = jnp.pad(p["w1"], ((0, 0), (0, 0), (0, c0p - C0), (0, 0)))
    w1col = w1col.reshape(K1 * K1 * c0p, C1)                               # (1152, 256)
    b1 = p["b1"].reshape(1, C1)

    # fold PyTorch's NCHW flatten order into fc1 row order (identity for 1x1 spatial)
    fw1 = p["fw1"].reshape(C1, hp1, wp1, FC1).transpose(1, 2, 0, 3).reshape(fc_in, FC1)
    f1p = _rup(FC1, LANE)                                                  # 128
    fw1 = jnp.pad(fw1, ((0, 0), (0, f1p - FC1)))
    fb1 = jnp.pad(p["fb1"].reshape(1, FC1), ((0, 0), (0, f1p - FC1)))
    f2p = _rup(FC2, LANE)                                                  # 128
    fw2 = jnp.pad(p["fw2"], ((0, f1p - FC1), (0, f2p - FC2)))
    fb2 = jnp.pad(p["fb2"].reshape(1, FC2), ((0, 0), (0, f2p - FC2)))

    kern = functools.partial(
        fused_forward_kernel,
        wo0=wo0, hp0=hp0, wp0=wp0, ho1=ho1, wo1=wo1, hp1=hp1, wp1=wp1)

    out = pl.pallas_call(
        kern,
        out_shape=jax.ShapeDtypeStruct((N, 1, f2p), jnp.float32),
        grid=(N,),
        in_specs=[
            pl.BlockSpec((None, ho0 * wo0, k0p), lambda n: (n, 0, 0)),   # patches
            pl.BlockSpec((k0p, c0p), lambda n: (0, 0)),                  # w0col
            pl.BlockSpec((1, c0p), lambda n: (0, 0)),                    # b0
            pl.BlockSpec((K1 * K1 * c0p, C1), lambda n: (0, 0)),         # w1col
            pl.BlockSpec((1, C1), lambda n: (0, 0)),                     # b1
            pl.BlockSpec((fc_in, f1p), lambda n: (0, 0)),                # fw1
            pl.BlockSpec((1, f1p), lambda n: (0, 0)),                    # fb1
            pl.BlockSpec((f1p, f2p), lambda n: (0, 0)),                  # fw2
            pl.BlockSpec((1, f2p), lambda n: (0, 0)),                    # fb2
        ],
        out_specs=pl.BlockSpec((None, 1, f2p), lambda n: (n, 0, 0)),
        compiler_params=pltpu.CompilerParams(
            dimension_semantics=("parallel",)),
    )(patches, w0col, b0, w1col, b1, fw1, fb1, fw2, fb2)

    return out[:, 0, :FC2]        # strip the lane padding -> (N, 2)


# ----------------------------------------------------------------------------
# Deterministic parameter init (shapes from oneConv.__init__)
# ----------------------------------------------------------------------------
def init_params(key, kernel_size, inputs, im_size):
    ho0 = (im_size - kernel_size) // 2 + 1
    hp0 = ho0 // 2
    ho1 = (hp0 - K1) // S1 + 1
    hp1 = ho1 // 2
    fc_in = hp1 * hp1 * C1

    ks = jax.random.split(key, 8)

    def conv_init(kw_key, kb_key, kh, kw, cin, cout):
        bound = 1.0 / math.sqrt(cin * kh * kw)
        w = jax.random.uniform(kw_key, (kh, kw, cin, cout), jnp.float32, -bound, bound)
        b = jax.random.uniform(kb_key, (cout,), jnp.float32, -bound, bound)
        return w, b

    def lin_init(kw_key, kb_key, fin, fout):
        bound = 1.0 / math.sqrt(fin)
        w = jax.random.uniform(kw_key, (fin, fout), jnp.float32, -bound, bound)
        b = jax.random.uniform(kb_key, (fout,), jnp.float32, -bound, bound)
        return w, b

    # NOTE: weights stored as (KH, KW, Cin, Cout) / (In, Out); transpose PyTorch
    # checkpoints ((Cout, Cin, KH, KW) / (Out, In)) before loading.
    w0, b0 = conv_init(ks[0], ks[1], kernel_size, kernel_size, inputs, C0)   # c0
    w1, b1 = conv_init(ks[2], ks[3], K1, K1, C0, C1)                         # c1
    fw1, fb1 = lin_init(ks[4], ks[5], fc_in, FC1)                            # fc1
    fw2, fb2 = lin_init(ks[6], ks[7], FC1, FC2)                              # fc2
    return dict(w0=w0, b0=b0, w1=w1, b1=b1, fw1=fw1, fb1=fb1, fw2=fw2, fb2=fb2), fc_in


# ----------------------------------------------------------------------------
# Plain-JAX reference (matches the PyTorch forward) for a self-check.
# ----------------------------------------------------------------------------
def reference_forward(x_nchw, p):
    x = jnp.transpose(x_nchw, (0, 2, 3, 1)).astype(jnp.float32)

    def conv(y, w, b, stride):
        y = jax.lax.conv_general_dilated(
            y, w, window_strides=(stride, stride), padding="VALID",
            dimension_numbers=("NHWC", "HWIO", "NHWC"))
        return jax.nn.leaky_relu(y + b, 0.01)

    def pool(y):
        return jax.lax.reduce_window(y, -jnp.inf, jax.lax.max,
                                     (1, 2, 2, 1), (1, 2, 2, 1), "VALID")

    x = pool(conv(x, p["w0"], p["b0"], 2))
    x = pool(conv(x, p["w1"], p["b1"], 2))
    x = jnp.transpose(x, (0, 3, 1, 2)).reshape(x.shape[0], -1)   # NCHW flatten
    x = jax.nn.leaky_relu(x @ p["fw1"] + p["fb1"], 0.01)
    return x @ p["fw2"] + p["fb2"]


# ----------------------------------------------------------------------------
if __name__ == "__main__":
    kernel_size = 5
    inputs = 3
    im_size = 33
    batch = 2

    key = jax.random.PRNGKey(0)
    k_param, k_x = jax.random.split(key)
    params, fc_in = init_params(k_param, kernel_size, inputs, im_size)

    x = jax.random.normal(k_x, (batch, inputs, im_size, im_size), jnp.float32)

    fwd = jax.jit(one_conv_forward, static_argnums=2)
    out = jax.block_until_ready(fwd(x, params, kernel_size))

    assert out.shape == (batch, FC2), out.shape
    assert fc_in == 256, fc_in

    ref = jax.block_until_ready(reference_forward(x, params))
    err = float(jnp.max(jnp.abs(out - ref)))
    assert err < 5e-2, f"max abs error vs XLA reference: {err}"

    print("KERNEL_OK")
</pallas_src>

<mosaic_0001>
module attributes {stable_mosaic.version = 11 : i64} {
  func.func @fused_forward_kernel(%arg0: i32, %arg1: memref<1x225x128xf32, #tpu.memory_space<vmem>>, %arg2: memref<128x128xf32, #tpu.memory_space<vmem>>, %arg3: memref<1x128xf32, #tpu.memory_space<vmem>>, %arg4: memref<1152x256xf32, #tpu.memory_space<vmem>>, %arg5: memref<1x256xf32, #tpu.memory_space<vmem>>, %arg6: memref<256x128xf32, #tpu.memory_space<vmem>>, %arg7: memref<1x128xf32, #tpu.memory_space<vmem>>, %arg8: memref<128x128xf32, #tpu.memory_space<vmem>>, %arg9: memref<1x128xf32, #tpu.memory_space<vmem>>, %arg10: memref<1x1x128xf32, #tpu.memory_space<vmem>>) attributes {dimension_semantics = [#tpu.dimension_semantics<parallel>], iteration_bounds = array<i64: 2>, scalar_prefetch = 0 : i64, scratch_operands = 0 : i64, tpu.core_type = #tpu.core_type<tc>, window_params = [{transform_indices = @transform_0, window_bounds = array<i64: 1, 225, 128>}, {pipeline_mode = #tpu.pipeline_mode<synchronous>, transform_indices = @transform_1, window_bounds = array<i64: 128, 128>}, {pipeline_mode = #tpu.pipeline_mode<synchronous>, transform_indices = @transform_2, window_bounds = array<i64: 1, 128>}, {pipeline_mode = #tpu.pipeline_mode<synchronous>, transform_indices = @transform_3, window_bounds = array<i64: 1152, 256>}, {pipeline_mode = #tpu.pipeline_mode<synchronous>, transform_indices = @transform_4, window_bounds = array<i64: 1, 256>}, {pipeline_mode = #tpu.pipeline_mode<synchronous>, transform_indices = @transform_5, window_bounds = array<i64: 256, 128>}, {pipeline_mode = #tpu.pipeline_mode<synchronous>, transform_indices = @transform_6, window_bounds = array<i64: 1, 128>}, {pipeline_mode = #tpu.pipeline_mode<synchronous>, transform_indices = @transform_7, window_bounds = array<i64: 128, 128>}, {pipeline_mode = #tpu.pipeline_mode<synchronous>, transform_indices = @transform_8, window_bounds = array<i64: 1, 128>}, {transform_indices = @transform_9, window_bounds = array<i64: 1, 1, 128>}]} {
    %c0 = arith.constant 0 : index
    %c0_0 = arith.constant 0 : index
    %c0_1 = arith.constant 0 : index
    %0 = vector.load %arg1[%c0, %c0_0, %c0_1] : memref<1x225x128xf32, #tpu.memory_space<vmem>>, vector<1x225x128xf32>
    %1 = vector.shape_cast %0 : vector<1x225x128xf32> to vector<225x128xf32>
    %c0_2 = arith.constant 0 : index
    %c0_3 = arith.constant 0 : index
    %2 = vector.load %arg2[%c0_2, %c0_3] : memref<128x128xf32, #tpu.memory_space<vmem>>, vector<128x128xf32>
    %cst = arith.constant dense<0.000000e+00> : vector<225x128xf32>
    %3 = tpu.matmul %1, %2, %cst {dimension_numbers = #tpu.dot_dimension_numbers<[1], [0], [0], [1], [0, 0, 1, 1], [], []>} : vector<225x128xf32>, vector<128x128xf32>, vector<225x128xf32> -> vector<225x128xf32>
    %c0_4 = arith.constant 0 : index
    %c0_5 = arith.constant 0 : index
    %4 = vector.load %arg3[%c0_4, %c0_5] : memref<1x128xf32, #tpu.memory_space<vmem>>, vector<1x128xf32>
    %5 = vector.broadcast %4 : vector<1x128xf32> to vector<225x128xf32>
    %6 = arith.addf %3, %5 : vector<225x128xf32>
    %cst_6 = arith.constant 0.000000e+00 : f32
    %7 = vector.broadcast %cst_6 : f32 to vector<225x128xf32>
    %8 = arith.cmpf ogt, %6, %7 : vector<225x128xf32>
    %cst_7 = arith.constant 0.00999999977 : f32
    %9 = vector.broadcast %cst_7 : f32 to vector<225x128xf32>
    %10 = arith.mulf %9, %6 : vector<225x128xf32>
    %11 = arith.select %8, %6, %10 : vector<225x128xi1>, vector<225x128xf32>
    %12 = vector.extract_strided_slice %11 {offsets = [0, 0], sizes = [15, 128], strides = [1, 1]} : vector<225x128xf32> to vector<15x128xf32>
    %13 = vector.extract_strided_slice %11 {offsets = [15, 0], sizes = [15, 128], strides = [1, 1]} : vector<225x128xf32> to vector<15x128xf32>
    %14 = arith.maximumf %12, %13 : vector<15x128xf32>
    %15 = vector.extract_strided_slice %14 {offsets = [0, 0], sizes = [1, 128], strides = [1, 1]} : vector<15x128xf32> to vector<1x128xf32>
    %16 = vector.extract_strided_slice %14 {offsets = [1, 0], sizes = [1, 128], strides = [1, 1]} : vector<15x128xf32> to vector<1x128xf32>
    %17 = arith.maximumf %15, %16 : vector<1x128xf32>
    %18 = vector.extract_strided_slice %14 {offsets = [2, 0], sizes = [1, 128], strides = [1, 1]} : vector<15x128xf32> to vector<1x128xf32>
    %19 = vector.extract_strided_slice %14 {offsets = [3, 0], sizes = [1, 128], strides = [1, 1]} : vector<15x128xf32> to vector<1x128xf32>
    %20 = arith.maximumf %18, %19 : vector<1x128xf32>
    %21 = vector.extract_strided_slice %14 {offsets = [4, 0], sizes = [1, 128], strides = [1, 1]} : vector<15x128xf32> to vector<1x128xf32>
    %22 = vector.extract_strided_slice %14 {offsets = [5, 0], sizes = [1, 128], strides = [1, 1]} : vector<15x128xf32> to vector<1x128xf32>
    %23 = arith.maximumf %21, %22 : vector<1x128xf32>
    %24 = vector.extract_strided_slice %14 {offsets = [6, 0], sizes = [1, 128], strides = [1, 1]} : vector<15x128xf32> to vector<1x128xf32>
    %25 = vector.extract_strided_slice %14 {offsets = [7, 0], sizes = [1, 128], strides = [1, 1]} : vector<15x128xf32> to vector<1x128xf32>
    %26 = arith.maximumf %24, %25 : vector<1x128xf32>
    %27 = vector.extract_strided_slice %14 {offsets = [8, 0], sizes = [1, 128], strides = [1, 1]} : vector<15x128xf32> to vector<1x128xf32>
    %28 = vector.extract_strided_slice %14 {offsets = [9, 0], sizes = [1, 128], strides = [1, 1]} : vector<15x128xf32> to vector<1x128xf32>
    %29 = arith.maximumf %27, %28 : vector<1x128xf32>
    %30 = vector.extract_strided_slice %14 {offsets = [10, 0], sizes = [1, 128], strides = [1, 1]} : vector<15x128xf32> to vector<1x128xf32>
    %31 = vector.extract_strided_slice %14 {offsets = [11, 0], sizes = [1, 128], strides = [1, 1]} : vector<15x128xf32> to vector<1x128xf32>
    %32 = arith.maximumf %30, %31 : vector<1x128xf32>
    %33 = vector.extract_strided_slice %14 {offsets = [12, 0], sizes = [1, 128], strides = [1, 1]} : vector<15x128xf32> to vector<1x128xf32>
    %34 = vector.extract_strided_slice %14 {offsets = [13, 0], sizes = [1, 128], strides = [1, 1]} : vector<15x128xf32> to vector<1x128xf32>
    %35 = arith.maximumf %33, %34 : vector<1x128xf32>
    %36 = vector.extract_strided_slice %11 {offsets = [30, 0], sizes = [15, 128], strides = [1, 1]} : vector<225x128xf32> to vector<15x128xf32>
    %37 = vector.extract_strided_slice %11 {offsets = [45, 0], sizes = [15, 128], strides = [1, 1]} : vector<225x128xf32> to vector<15x128xf32>
    %38 = arith.maximumf %36, %37 : vector<15x128xf32>
    %39 = vector.extract_strided_slice %38 {offsets = [0, 0], sizes = [1, 128], strides = [1, 1]} : vector<15x128xf32> to vector<1x128xf32>
    %40 = vector.extract_strided_slice %38 {offsets = [1, 0], sizes = [1, 128], strides = [1, 1]} : vector<15x128xf32> to vector<1x128xf32>
    %41 = arith.maximumf %39, %40 : vector<1x128xf32>
    %42 = vector.extract_strided_slice %38 {offsets = [2, 0], sizes = [1, 128], strides = [1, 1]} : vector<15x128xf32> to vector<1x128xf32>
    %43 = vector.extract_strided_slice %38 {offsets = [3, 0], sizes = [1, 128], strides = [1, 1]} : vector<15x128xf32> to vector<1x128xf32>
    %44 = arith.maximumf %42, %43 : vector<1x128xf32>
    %45 = vector.extract_strided_slice %38 {offsets = [4, 0], sizes = [1, 128], strides = [1, 1]} : vector<15x128xf32> to vector<1x128xf32>
    %46 = vector.extract_strided_slice %38 {offsets = [5, 0], sizes = [1, 128], strides = [1, 1]} : vector<15x128xf32> to vector<1x128xf32>
    %47 = arith.maximumf %45, %46 : vector<1x128xf32>
    %48 = vector.extract_strided_slice %38 {offsets = [6, 0], sizes = [1, 128], strides = [1, 1]} : vector<15x128xf32> to vector<1x128xf32>
    %49 = vector.extract_strided_slice %38 {offsets = [7, 0], sizes = [1, 128], strides = [1, 1]} : vector<15x128xf32> to vector<1x128xf32>
    %50 = arith.maximumf %48, %49 : vector<1x128xf32>
    %51 = vector.extract_strided_slice %38 {offsets = [8, 0], sizes = [1, 128], strides = [1, 1]} : vector<15x128xf32> to vector<1x128xf32>
    %52 = vector.extract_strided_slice %38 {offsets = [9, 0], sizes = [1, 128], strides = [1, 1]} : vector<15x128xf32> to vector<1x128xf32>
    %53 = arith.maximumf %51, %52 : vector<1x128xf32>
    %54 = vector.extract_strided_slice %38 {offsets = [10, 0], sizes = [1, 128], strides = [1, 1]} : vector<15x128xf32> to vector<1x128xf32>
    %55 = vector.extract_strided_slice %38 {offsets = [11, 0], sizes = [1, 128], strides = [1, 1]} : vector<15x128xf32> to vector<1x128xf32>
    %56 = arith.maximumf %54, %55 : vector<1x128xf32>
    %57 = vector.extract_strided_slice %38 {offsets = [12, 0], sizes = [1, 128], strides = [1, 1]} : vector<15x128xf32> to vector<1x128xf32>
    %58 = vector.extract_strided_slice %38 {offsets = [13, 0], sizes = [1, 128], strides = [1, 1]} : vector<15x128xf32> to vector<1x128xf32>
    %59 = arith.maximumf %57, %58 : vector<1x128xf32>
    %60 = vector.extract_strided_slice %11 {offsets = [60, 0], sizes = [15, 128], strides = [1, 1]} : vector<225x128xf32> to vector<15x128xf32>
    %61 = vector.extract_strided_slice %11 {offsets = [75, 0], sizes = [15, 128], strides = [1, 1]} : vector<225x128xf32> to vector<15x128xf32>
    %62 = arith.maximumf %60, %61 : vector<15x128xf32>
    %63 = vector.extract_strided_slice %62 {offsets = [0, 0], sizes = [1, 128], strides = [1, 1]} : vector<15x128xf32> to vector<1x128xf32>
    %64 = vector.extract_strided_slice %62 {offsets = [1, 0], sizes = [1, 128], strides = [1, 1]} : vector<15x128xf32> to vector<1x128xf32>
    %65 = arith.maximumf %63, %64 : vector<1x128xf32>
    %66 = vector.extract_strided_slice %62 {offsets = [2, 0], sizes = [1, 128], strides = [1, 1]} : vector<15x128xf32> to vector<1x128xf32>
    %67 = vector.extract_strided_slice %62 {offsets = [3, 0], sizes = [1, 128], strides = [1, 1]} : vector<15x128xf32> to vector<1x128xf32>
    %68 = arith.maximumf %66, %67 : vector<1x128xf32>
    %69 = vector.extract_strided_slice %62 {offsets = [4, 0], sizes = [1, 128], strides = [1, 1]} : vector<15x128xf32> to vector<1x128xf32>
    %70 = vector.extract_strided_slice %62 {offsets = [5, 0], sizes = [1, 128], strides = [1, 1]} : vector<15x128xf32> to vector<1x128xf32>
    %71 = arith.maximumf %69, %70 : vector<1x128xf32>
    %72 = vector.extract_strided_slice %62 {offsets = [6, 0], sizes = [1, 128], strides = [1, 1]} : vector<15x128xf32> to vector<1x128xf32>
    %73 = vector.extract_strided_slice %62 {offsets = [7, 0], sizes = [1, 128], strides = [1, 1]} : vector<15x128xf32> to vector<1x128xf32>
    %74 = arith.maximumf %72, %73 : vector<1x128xf32>
    %75 = vector.extract_strided_slice %62 {offsets = [8, 0], sizes = [1, 128], strides = [1, 1]} : vector<15x128xf32> to vector<1x128xf32>
    %76 = vector.extract_strided_slice %62 {offsets = [9, 0], sizes = [1, 128], strides = [1, 1]} : vector<15x128xf32> to vector<1x128xf32>
    %77 = arith.maximumf %75, %76 : vector<1x128xf32>
    %78 = vector.extract_strided_slice %62 {offsets = [10, 0], sizes = [1, 128], strides = [1, 1]} : vector<15x128xf32> to vector<1x128xf32>
    %79 = vector.extract_strided_slice %62 {offsets = [11, 0], sizes = [1, 128], strides = [1, 1]} : vector<15x128xf32> to vector<1x128xf32>
    %80 = arith.maximumf %78, %79 : vector<1x128xf32>
    %81 = vector.extract_strided_slice %62 {offsets = [12, 0], sizes = [1, 128], strides = [1, 1]} : vector<15x128xf32> to vector<1x128xf32>
    %82 = vector.extract_strided_slice %62 {offsets = [13, 0], sizes = [1, 128], strides = [1, 1]} : vector<15x128xf32> to vector<1x128xf32>
    %83 = arith.maximumf %81, %82 : vector<1x128xf32>
    %84 = vector.extract_strided_slice %11 {offsets = [90, 0], sizes = [15, 128], strides = [1, 1]} : vector<225x128xf32> to vector<15x128xf32>
    %85 = vector.extract_strided_slice %11 {offsets = [105, 0], sizes = [15, 128], strides = [1, 1]} : vector<225x128xf32> to vector<15x128xf32>
    %86 = arith.maximumf %84, %85 : vector<15x128xf32>
    %87 = vector.extract_strided_slice %86 {offsets = [0, 0], sizes = [1, 128], strides = [1, 1]} : vector<15x128xf32> to vector<1x128xf32>
    %88 = vector.extract_strided_slice %86 {offsets = [1, 0], sizes = [1, 128], strides = [1, 1]} : vector<15x128xf32> to vector<1x128xf32>
    %89 = arith.maximumf %87, %88 : vector<1x128xf32>
    %90 = vector.extract_strided_slice %86 {offsets = [2, 0], sizes = [1, 128], strides = [1, 1]} : vector<15x128xf32> to vector<1x128xf32>
    %91 = vector.extract_strided_slice %86 {offsets = [3, 0], sizes = [1, 128], strides = [1, 1]} : vector<15x128xf32> to vector<1x128xf32>
    %92 = arith.maximumf %90, %91 : vector<1x128xf32>
    %93 = vector.extract_strided_slice %86 {offsets = [4, 0], sizes = [1, 128], strides = [1, 1]} : vector<15x128xf32> to vector<1x128xf32>
    %94 = vector.extract_strided_slice %86 {offsets = [5, 0], sizes = [1, 128], strides = [1, 1]} : vector<15x128xf32> to vector<1x128xf32>
    %95 = arith.maximumf %93, %94 : vector<1x128xf32>
    %96 = vector.extract_strided_slice %86 {offsets = [6, 0], sizes = [1, 128], strides = [1, 1]} : vector<15x128xf32> to vector<1x128xf32>
    %97 = vector.extract_strided_slice %86 {offsets = [7, 0], sizes = [1, 128], strides = [1, 1]} : vector<15x128xf32> to vector<1x128xf32>
    %98 = arith.maximumf %96, %97 : vector<1x128xf32>
    %99 = vector.extract_strided_slice %86 {offsets = [8, 0], sizes = [1, 128], strides = [1, 1]} : vector<15x128xf32> to vector<1x128xf32>
    %100 = vector.extract_strided_slice %86 {offsets = [9, 0], sizes = [1, 128], strides = [1, 1]} : vector<15x128xf32> to vector<1x128xf32>
    %101 = arith.maximumf %99, %100 : vector<1x128xf32>
    %102 = vector.extract_strided_slice %86 {offsets = [10, 0], sizes = [1, 128], strides = [1, 1]} : vector<15x128xf32> to vector<1x128xf32>
    %103 = vector.extract_strided_slice %86 {offsets = [11, 0], sizes = [1, 128], strides = [1, 1]} : vector<15x128xf32> to vector<1x128xf32>
    %104 = arith.maximumf %102, %103 : vector<1x128xf32>
    %105 = vector.extract_strided_slice %86 {offsets = [12, 0], sizes = [1, 128], strides = [1, 1]} : vector<15x128xf32> to vector<1x128xf32>
    %106 = vector.extract_strided_slice %86 {offsets = [13, 0], sizes = [1, 128], strides = [1, 1]} : vector<15x128xf32> to vector<1x128xf32>
    %107 = arith.maximumf %105, %106 : vector<1x128xf32>
    %108 = vector.extract_strided_slice %11 {offsets = [120, 0], sizes = [15, 128], strides = [1, 1]} : vector<225x128xf32> to vector<15x128xf32>
    %109 = vector.extract_strided_slice %11 {offsets = [135, 0], sizes = [15, 128], strides = [1, 1]} : vector<225x128xf32> to vector<15x128xf32>
    %110 = arith.maximumf %108, %109 : vector<15x128xf32>
    %111 = vector.extract_strided_slice %110 {offsets = [0, 0], sizes = [1, 128], strides = [1, 1]} : vector<15x128xf32> to vector<1x128xf32>
    %112 = vector.extract_strided_slice %110 {offsets = [1, 0], sizes = [1, 128], strides = [1, 1]} : vector<15x128xf32> to vector<1x128xf32>
    %113 = arith.maximumf %111, %112 : vector<1x128xf32>
    %114 = vector.extract_strided_slice %110 {offsets = [2, 0], sizes = [1, 128], strides = [1, 1]} : vector<15x128xf32> to vector<1x128xf32>
    %115 = vector.extract_strided_slice %110 {offsets = [3, 0], sizes = [1, 128], strides = [1, 1]} : vector<15x128xf32> to vector<1x128xf32>
    %116 = arith.maximumf %114, %115 : vector<1x128xf32>
    %117 = vector.extract_strided_slice %110 {offsets = [4, 0], sizes = [1, 128], strides = [1, 1]} : vector<15x128xf32> to vector<1x128xf32>
    %118 = vector.extract_strided_slice %110 {offsets = [5, 0], sizes = [1, 128], strides = [1, 1]} : vector<15x128xf32> to vector<1x128xf32>
    %119 = arith.maximumf %117, %118 : vector<1x128xf32>
    %120 = vector.extract_strided_slice %110 {offsets = [6, 0], sizes = [1, 128], strides = [1, 1]} : vector<15x128xf32> to vector<1x128xf32>
    %121 = vector.extract_strided_slice %110 {offsets = [7, 0], sizes = [1, 128], strides = [1, 1]} : vector<15x128xf32> to vector<1x128xf32>
    %122 = arith.maximumf %120, %121 : vector<1x128xf32>
    %123 = vector.extract_strided_slice %110 {offsets = [8, 0], sizes = [1, 128], strides = [1, 1]} : vector<15x128xf32> to vector<1x128xf32>
    %124 = vector.extract_strided_slice %110 {offsets = [9, 0], sizes = [1, 128], strides = [1, 1]} : vector<15x128xf32> to vector<1x128xf32>
    %125 = arith.maximumf %123, %124 : vector<1x128xf32>
    %126 = vector.extract_strided_slice %110 {offsets = [10, 0], sizes = [1, 128], strides = [1, 1]} : vector<15x128xf32> to vector<1x128xf32>
    %127 = vector.extract_strided_slice %110 {offsets = [11, 0], sizes = [1, 128], strides = [1, 1]} : vector<15x128xf32> to vector<1x128xf32>
    %128 = arith.maximumf %126, %127 : vector<1x128xf32>
    %129 = vector.extract_strided_slice %110 {offsets = [12, 0], sizes = [1, 128], strides = [1, 1]} : vector<15x128xf32> to vector<1x128xf32>
    %130 = vector.extract_strided_slice %110 {offsets = [13, 0], sizes = [1, 128], strides = [1, 1]} : vector<15x128xf32> to vector<1x128xf32>
    %131 = arith.maximumf %129, %130 : vector<1x128xf32>
    %132 = vector.extract_strided_slice %11 {offsets = [150, 0], sizes = [15, 128], strides = [1, 1]} : vector<225x128xf32> to vector<15x128xf32>
    %133 = vector.extract_strided_slice %11 {offsets = [165, 0], sizes = [15, 128], strides = [1, 1]} : vector<225x128xf32> to vector<15x128xf32>
    %134 = arith.maximumf %132, %133 : vector<15x128xf32>
    %135 = vector.extract_strided_slice %134 {offsets = [0, 0], sizes = [1, 128], strides = [1, 1]} : vector<15x128xf32> to vector<1x128xf32>
    %136 = vector.extract_strided_slice %134 {offsets = [1, 0], sizes = [1, 128], strides = [1, 1]} : vector<15x128xf32> to vector<1x128xf32>
    %137 = arith.maximumf %135, %136 : vector<1x128xf32>
    %138 = vector.extract_strided_slice %134 {offsets = [2, 0], sizes = [1, 128], strides = [1, 1]} : vector<15x128xf32> to vector<1x128xf32>
    %139 = vector.extract_strided_slice %134 {offsets = [3, 0], sizes = [1, 128], strides = [1, 1]} : vector<15x128xf32> to vector<1x128xf32>
    %140 = arith.maximumf %138, %139 : vector<1x128xf32>
    %141 = vector.extract_strided_slice %134 {offsets = [4, 0], sizes = [1, 128], strides = [1, 1]} : vector<15x128xf32> to vector<1x128xf32>
    %142 = vector.extract_strided_slice %134 {offsets = [5, 0], sizes = [1, 128], strides = [1, 1]} : vector<15x128xf32> to vector<1x128xf32>
    %143 = arith.maximumf %141, %142 : vector<1x128xf32>
    %144 = vector.extract_strided_slice %134 {offsets = [6, 0], sizes = [1, 128], strides = [1, 1]} : vector<15x128xf32> to vector<1x128xf32>
    %145 = vector.extract_strided_slice %134 {offsets = [7, 0], sizes = [1, 128], strides = [1, 1]} : vector<15x128xf32> to vector<1x128xf32>
    %146 = arith.maximumf %144, %145 : vector<1x128xf32>
    %147 = vector.extract_strided_slice %134 {offsets = [8, 0], sizes = [1, 128], strides = [1, 1]} : vector<15x128xf32> to vector<1x128xf32>
    %148 = vector.extract_strided_slice %134 {offsets = [9, 0], sizes = [1, 128], strides = [1, 1]} : vector<15x128xf32> to vector<1x128xf32>
    %149 = arith.maximumf %147, %148 : vector<1x128xf32>
    %150 = vector.extract_strided_slice %134 {offsets = [10, 0], sizes = [1, 128], strides = [1, 1]} : vector<15x128xf32> to vector<1x128xf32>
    %151 = vector.extract_strided_slice %134 {offsets = [11, 0], sizes = [1, 128], strides = [1, 1]} : vector<15x128xf32> to vector<1x128xf32>
    %152 = arith.maximumf %150, %151 : vector<1x128xf32>
    %153 = vector.extract_strided_slice %134 {offsets = [12, 0], sizes = [1, 128], strides = [1, 1]} : vector<15x128xf32> to vector<1x128xf32>
    %154 = vector.extract_strided_slice %134 {offsets = [13, 0], sizes = [1, 128], strides = [1, 1]} : vector<15x128xf32> to vector<1x128xf32>
    %155 = arith.maximumf %153, %154 : vector<1x128xf32>
    %156 = vector.extract_strided_slice %11 {offsets = [180, 0], sizes = [15, 128], strides = [1, 1]} : vector<225x128xf32> to vector<15x128xf32>
    %157 = vector.extract_strided_slice %11 {offsets = [195, 0], sizes = [15, 128], strides = [1, 1]} : vector<225x128xf32> to vector<15x128xf32>
    %158 = arith.maximumf %156, %157 : vector<15x128xf32>
    %159 = vector.extract_strided_slice %158 {offsets = [0, 0], sizes = [1, 128], strides = [1, 1]} : vector<15x128xf32> to vector<1x128xf32>
    %160 = vector.extract_strided_slice %158 {offsets = [1, 0], sizes = [1, 128], strides = [1, 1]} : vector<15x128xf32> to vector<1x128xf32>
    %161 = arith.maximumf %159, %160 : vector<1x128xf32>
    %162 = vector.extract_strided_slice %158 {offsets = [2, 0], sizes = [1, 128], strides = [1, 1]} : vector<15x128xf32> to vector<1x128xf32>
    %163 = vector.extract_strided_slice %158 {offsets = [3, 0], sizes = [1, 128], strides = [1, 1]} : vector<15x128xf32> to vector<1x128xf32>
    %164 = arith.maximumf %162, %163 : vector<1x128xf32>
    %165 = vector.extract_strided_slice %158 {offsets = [4, 0], sizes = [1, 128], strides = [1, 1]} : vector<15x128xf32> to vector<1x128xf32>
    %166 = vector.extract_strided_slice %158 {offsets = [5, 0], sizes = [1, 128], strides = [1, 1]} : vector<15x128xf32> to vector<1x128xf32>
    %167 = arith.maximumf %165, %166 : vector<1x128xf32>
    %168 = vector.extract_strided_slice %158 {offsets = [6, 0], sizes = [1, 128], strides = [1, 1]} : vector<15x128xf32> to vector<1x128xf32>
    %169 = vector.extract_strided_slice %158 {offsets = [7, 0], sizes = [1, 128], strides = [1, 1]} : vector<15x128xf32> to vector<1x128xf32>
    %170 = arith.maximumf %168, %169 : vector<1x128xf32>
    %171 = vector.extract_strided_slice %158 {offsets = [8, 0], sizes = [1, 128], strides = [1, 1]} : vector<15x128xf32> to vector<1x128xf32>
    %172 = vector.extract_strided_slice %158 {offsets = [9, 0], sizes = [1, 128], strides = [1, 1]} : vector<15x128xf32> to vector<1x128xf32>
    %173 = arith.maximumf %171, %172 : vector<1x128xf32>
    %174 = vector.extract_strided_slice %158 {offsets = [10, 0], sizes = [1, 128], strides = [1, 1]} : vector<15x128xf32> to vector<1x128xf32>
    %175 = vector.extract_strided_slice %158 {offsets = [11, 0], sizes = [1, 128], strides = [1, 1]} : vector<15x128xf32> to vector<1x128xf32>
    %176 = arith.maximumf %174, %175 : vector<1x128xf32>
    %177 = vector.extract_strided_slice %158 {offsets = [12, 0], sizes = [1, 128], strides = [1, 1]} : vector<15x128xf32> to vector<1x128xf32>
    %178 = vector.extract_strided_slice %158 {offsets = [13, 0], sizes = [1, 128], strides = [1, 1]} : vector<15x128xf32> to vector<1x128xf32>
    %179 = arith.maximumf %177, %178 : vector<1x128xf32>
    %180 = tpu.concatenate %17, %20, %23, %41, %44, %47, %65, %68, %71 in 1 : vector<1x128xf32>, vector<1x128xf32>, vector<1x128xf32>, vector<1x128xf32>, vector<1x128xf32>, vector<1x128xf32>, vector<1x128xf32>, vector<1x128xf32>, vector<1x128xf32> -> vector<1x1152xf32>
    %181 = tpu.concatenate %23, %26, %29, %47, %50, %53, %71, %74, %77 in 1 : vector<1x128xf32>, vector<1x128xf32>, vector<1x128xf32>, vector<1x128xf32>, vector<1x128xf32>, vector<1x128xf32>, vector<1x128xf32>, vector<1x128xf32>, vector<1x128xf32> -> vector<1x1152xf32>
    %182 = tpu.concatenate %29, %32, %35, %53, %56, %59, %77, %80, %83 in 1 : vector<1x128xf32>, vector<1x128xf32>, vector<1x128xf32>, vector<1x128xf32>, vector<1x128xf32>, vector<1x128xf32>, vector<1x128xf32>, vector<1x128xf32>, vector<1x128xf32> -> vector<1x1152xf32>
    %183 = tpu.concatenate %65, %68, %71, %89, %92, %95, %113, %116, %119 in 1 : vector<1x128xf32>, vector<1x128xf32>, vector<1x128xf32>, vector<1x128xf32>, vector<1x128xf32>, vector<1x128xf32>, vector<1x128xf32>, vector<1x128xf32>, vector<1x128xf32> -> vector<1x1152xf32>
    %184 = tpu.concatenate %71, %74, %77, %95, %98, %101, %119, %122, %125 in 1 : vector<1x128xf32>, vector<1x128xf32>, vector<1x128xf32>, vector<1x128xf32>, vector<1x128xf32>, vector<1x128xf32>, vector<1x128xf32>, vector<1x128xf32>, vector<1x128xf32> -> vector<1x1152xf32>
    %185 = tpu.concatenate %77, %80, %83, %101, %104, %107, %125, %128, %131 in 1 : vector<1x128xf32>, vector<1x128xf32>, vector<1x128xf32>, vector<1x128xf32>, vector<1x128xf32>, vector<1x128xf32>, vector<1x128xf32>, vector<1x128xf32>, vector<1x128xf32> -> vector<1x1152xf32>
    %186 = tpu.concatenate %113, %116, %119, %137, %140, %143, %161, %164, %167 in 1 : vector<1x128xf32>, vector<1x128xf32>, vector<1x128xf32>, vector<1x128xf32>, vector<1x128xf32>, vector<1x128xf32>, vector<1x128xf32>, vector<1x128xf32>, vector<1x128xf32> -> vector<1x1152xf32>
    %187 = tpu.concatenate %119, %122, %125, %143, %146, %149, %167, %170, %173 in 1 : vector<1x128xf32>, vector<1x128xf32>, vector<1x128xf32>, vector<1x128xf32>, vector<1x128xf32>, vector<1x128xf32>, vector<1x128xf32>, vector<1x128xf32>, vector<1x128xf32> -> vector<1x1152xf32>
    %188 = tpu.concatenate %125, %128, %131, %149, %152, %155, %173, %176, %179 in 1 : vector<1x128xf32>, vector<1x128xf32>, vector<1x128xf32>, vector<1x128xf32>, vector<1x128xf32>, vector<1x128xf32>, vector<1x128xf32>, vector<1x128xf32>, vector<1x128xf32> -> vector<1x1152xf32>
    %189 = tpu.concatenate %180, %181, %182, %183, %184, %185, %186, %187, %188 in 0 : vector<1x1152xf32>, vector<1x1152xf32>, vector<1x1152xf32>, vector<1x1152xf32>, vector<1x1152xf32>, vector<1x1152xf32>, vector<1x1152xf32>, vector<1x1152xf32>, vector<1x1152xf32> -> vector<9x1152xf32>
    %c0_8 = arith.constant 0 : index
    %c0_9 = arith.constant 0 : index
    %190 = vector.load %arg4[%c0_8, %c0_9] : memref<1152x256xf32, #tpu.memory_space<vmem>>, vector<1152x256xf32>
    %cst_10 = arith.constant dense<0.000000e+00> : vector<9x256xf32>
    %191 = tpu.matmul %189, %190, %cst_10 {dimension_numbers = #tpu.dot_dimension_numbers<[1], [0], [0], [1], [0, 0, 1, 1], [], []>} : vector<9x1152xf32>, vector<1152x256xf32>, vector<9x256xf32> -> vector<9x256xf32>
    %c0_11 = arith.constant 0 : index
    %c0_12 = arith.constant 0 : index
    %192 = vector.load %arg5[%c0_11, %c0_12] : memref<1x256xf32, #tpu.memory_space<vmem>>, vector<1x256xf32>
    %193 = vector.broadcast %192 : vector<1x256xf32> to vector<9x256xf32>
    %194 = arith.addf %191, %193 : vector<9x256xf32>
    %cst_13 = arith.constant 0.000000e+00 : f32
    %195 = vector.broadcast %cst_13 : f32 to vector<9x256xf32>
    %196 = arith.cmpf ogt, %194, %195 : vector<9x256xf32>
    %cst_14 = arith.constant 0.00999999977 : f32
    %197 = vector.broadcast %cst_14 : f32 to vector<9x256xf32>
    %198 = arith.mulf %197, %194 : vector<9x256xf32>
    %199 = arith.select %196, %194, %198 : vector<9x256xi1>, vector<9x256xf32>
    %200 = vector.extract_strided_slice %199 {offsets = [0, 0], sizes = [1, 256], strides = [1, 1]} : vector<9x256xf32> to vector<1x256xf32>
    %201 = vector.extract_strided_slice %199 {offsets = [1, 0], sizes = [1, 256], strides = [1, 1]} : vector<9x256xf32> to vector<1x256xf32>
    %202 = arith.maximumf %200, %201 : vector<1x256xf32>
    %203 = vector.extract_strided_slice %199 {offsets = [3, 0], sizes = [1, 256], strides = [1, 1]} : vector<9x256xf32> to vector<1x256xf32>
    %204 = vector.extract_strided_slice %199 {offsets = [4, 0], sizes = [1, 256], strides = [1, 1]} : vector<9x256xf32> to vector<1x256xf32>
    %205 = arith.maximumf %203, %204 : vector<1x256xf32>
    %206 = arith.maximumf %202, %205 : vector<1x256xf32>
    %c0_15 = arith.constant 0 : index
    %c0_16 = arith.constant 0 : index
    %207 = vector.load %arg6[%c0_15, %c0_16] : memref<256x128xf32, #tpu.memory_space<vmem>>, vector<256x128xf32>
    %cst_17 = arith.constant dense<0.000000e+00> : vector<1x128xf32>
    %208 = tpu.matmul %206, %207, %cst_17 {dimension_numbers = #tpu.dot_dimension_numbers<[1], [0], [0], [1], [0, 0, 1, 1], [], []>} : vector<1x256xf32>, vector<256x128xf32>, vector<1x128xf32> -> vector<1x128xf32>
    %c0_18 = arith.constant 0 : index
    %c0_19 = arith.constant 0 : index
    %209 = vector.load %arg7[%c0_18, %c0_19] : memref<1x128xf32, #tpu.memory_space<vmem>>, vector<1x128xf32>
    %210 = arith.addf %208, %209 : vector<1x128xf32>
    %cst_20 = arith.constant 0.000000e+00 : f32
    %211 = vector.broadcast %cst_20 : f32 to vector<1x128xf32>
    %212 = arith.cmpf ogt, %210, %211 : vector<1x128xf32>
    %cst_21 = arith.constant 0.00999999977 : f32
    %213 = vector.broadcast %cst_21 : f32 to vector<1x128xf32>
    %214 = arith.mulf %213, %210 : vector<1x128xf32>
    %215 = arith.select %212, %210, %214 : vector<1x128xi1>, vector<1x128xf32>
    %c0_22 = arith.constant 0 : index
    %c0_23 = arith.constant 0 : index
    %216 = vector.load %arg8[%c0_22, %c0_23] : memref<128x128xf32, #tpu.memory_space<vmem>>, vector<128x128xf32>
    %cst_24 = arith.constant dense<0.000000e+00> : vector<1x128xf32>
    %217 = tpu.matmul %215, %216, %cst_24 {dimension_numbers = #tpu.dot_dimension_numbers<[1], [0], [0], [1], [0, 0, 1, 1], [], []>} : vector<1x128xf32>, vector<128x128xf32>, vector<1x128xf32> -> vector<1x128xf32>
    %c0_25 = arith.constant 0 : index
    %c0_26 = arith.constant 0 : index
    %218 = vector.load %arg9[%c0_25, %c0_26] : memref<1x128xf32, #tpu.memory_space<vmem>>, vector<1x128xf32>
    %219 = arith.addf %217, %218 : vector<1x128xf32>
    %c0_27 = arith.constant 0 : index
    %c0_28 = arith.constant 0 : index
    %c0_29 = arith.constant 0 : index
    %220 = vector.load %arg10[%c0_27, %c0_28, %c0_29] : memref<1x1x128xf32, #tpu.memory_space<vmem>>, vector<1x1x128xf32>
    %221 = vector.shape_cast %220 : vector<1x1x128xf32> to vector<1x128xf32>
    %222 = vector.shape_cast %219 : vector<1x128xf32> to vector<1x1x128xf32>
    tpu.vector_store %arg10[%c0_27, %c0_28, %c0_29], %222 {strides = array<i32>} : memref<1x1x128xf32, #tpu.memory_space<vmem>>, vector<1x1x128xf32>,
    return
  }
  func.func @transform_0(%arg0: i32) -> (i32, i32, i32) {
    %c0_i32 = arith.constant 0 : i32
    %c0_i32_0 = arith.constant 0 : i32
    %c0_i32_1 = arith.constant 0 : i32
    return %arg0, %c0_i32, %c0_i32_0 : i32, i32, i32
  }
  func.func @transform_1(%arg0: i32) -> (i32, i32) {
    %c0_i32 = arith.constant 0 : i32
    %c0_i32_0 = arith.constant 0 : i32
    %c0_i32_1 = arith.constant 0 : i32
    return %c0_i32, %c0_i32_0 : i32, i32
  }
  func.func @transform_2(%arg0: i32) -> (i32, i32) {
    %c0_i32 = arith.constant 0 : i32
    %c0_i32_0 = arith.constant 0 : i32
    %c0_i32_1 = arith.constant 0 : i32
    return %c0_i32, %c0_i32_0 : i32, i32
  }
  func.func @transform_3(%arg0: i32) -> (i32, i32) {
    %c0_i32 = arith.constant 0 : i32
    %c0_i32_0 = arith.constant 0 : i32
    %c0_i32_1 = arith.constant 0 : i32
    return %c0_i32, %c0_i32_0 : i32, i32
  }
  func.func @transform_4(%arg0: i32) -> (i32, i32) {
    %c0_i32 = arith.constant 0 : i32
    %c0_i32_0 = arith.constant 0 : i32
    %c0_i32_1 = arith.constant 0 : i32
    return %c0_i32, %c0_i32_0 : i32, i32
  }
  func.func @transform_5(%arg0: i32) -> (i32, i32) {
    %c0_i32 = arith.constant 0 : i32
    %c0_i32_0 = arith.constant 0 : i32
    %c0_i32_1 = arith.constant 0 : i32
    return %c0_i32, %c0_i32_0 : i32, i32
  }
  func.func @transform_6(%arg0: i32) -> (i32, i32) {
    %c0_i32 = arith.constant 0 : i32
    %c0_i32_0 = arith.constant 0 : i32
    %c0_i32_1 = arith.constant 0 : i32
    return %c0_i32, %c0_i32_0 : i32, i32
  }
  func.func @transform_7(%arg0: i32) -> (i32, i32) {
    %c0_i32 = arith.constant 0 : i32
    %c0_i32_0 = arith.constant 0 : i32
    %c0_i32_1 = arith.constant 0 : i32
    return %c0_i32, %c0_i32_0 : i32, i32
  }
  func.func @transform_8(%arg0: i32) -> (i32, i32) {
    %c0_i32 = arith.constant 0 : i32
    %c0_i32_0 = arith.constant 0 : i32
    %c0_i32_1 = arith.constant 0 : i32
    return %c0_i32, %c0_i32_0 : i32, i32
  }
  func.func @transform_9(%arg0: i32) -> (i32, i32, i32) {
    %c0_i32 = arith.constant 0 : i32
    %c0_i32_0 = arith.constant 0 : i32
    %c0_i32_1 = arith.constant 0 : i32
    return %arg0, %c0_i32, %c0_i32_0 : i32, i32, i32
  }
}

</mosaic_0001>

<llo_original>
// kernel: one_conv_forward.1
$region0: #{one_conv_forward.1}
  #allocation0 [shape = 'u32[]', space=smem, size = 0x4, offset = 0x4, fixed_abs, tag = 'smem constant byte address 0x4 - core index']
  #allocation1 [shape = 'u32[144,128]{1,0:T(1,128)}', space=vmem, size = 0x12000, scoped, tag = 'internal scratch']
  %s0 = inlined_call_operand.vmem [shape: f32[2,225,128], index: 0, kind: input, shape index: {}]
  %s1 = inlined_call_operand.vmem [shape: f32[128,128], index: 1, kind: input, shape index: {}]
  %s2 = inlined_call_operand.vmem [shape: f32[1,128], index: 2, kind: input, shape index: {}]
  %s3 = inlined_call_operand.vmem [shape: f32[1152,256], index: 3, kind: input, shape index: {}]
  %s4 = inlined_call_operand.vmem [shape: f32[1,256], index: 4, kind: input, shape index: {}]
  %s5 = inlined_call_operand.vmem [shape: f32[256,128], index: 5, kind: input, shape index: {}]
  %s6 = inlined_call_operand.vmem [shape: f32[1,128], index: 6, kind: input, shape index: {}]
  %s7 = inlined_call_operand.vmem [shape: f32[128,128], index: 7, kind: input, shape index: {}]
  %s8 = inlined_call_operand.vmem [shape: f32[1,128], index: 8, kind: input, shape index: {}]
  %s9 = inlined_call_operand.hbm [shape: f32[2,1,128], index: 9, kind: output, shape index: {}]
  %s10 = sld [smem:[#allocation0]]
  $region69: #{one_conv_forward.1} parent=0
    _
  %s12 = ssub.s32 1, %s10
  %s13 = scalar_select 0, %s12, %s10
  $region1: #{one_conv_forward.1} parent=0
    #allocation2 [shape = 'u8[1024]{0}', space=vmem, size = 0x400, scoped, tag = 'output window, operand 0']
    #allocation3 [shape = 's32[2]{0}', space=sflag, size = 0x8, scoped, tag = 'scoped memory for one_conv_forward.1']
    %14 = vsyncpa [#allocation3], 0
    %s15 = scalar_lea.sflag [#allocation3], 1
    %16 = vsyncpa %s15, 0
    loop: start=0, step=1, limit=4
    $region2: #{one_conv_forward.1} parent=1 // loop_pre_header
      _
    $region3: #{one_conv_forward.1} parent=1 // loop_header
      %s18 = sphi 0, %s22
      %p19 = scmp.ge.s32.totalorder %s18, 4
      %s28 = sphi 0, %s30
      %s31 = sphi 0, %s28
      %s32 = sphi 0, %s31
      %s48 = sphi 0, %s32
      %s52 = sphi 0, %s52
      %s54 = sphi 0, %s52
      %s55 = sphi 0, %s54
      %s69 = sphi 0, %s55
      %s73 = sphi 0, %s73
      %s75 = sphi 0, %s73
      %s76 = sphi 0, %s75
      %s90 = sphi 0, %s76
      %s94 = sphi 0, %s94
      %s96 = sphi 0, %s94
      %s97 = sphi 0, %s96
      %s111 = sphi 0, %s97
      %s115 = sphi 0, %s115
      %s117 = sphi 0, %s115
      %s118 = sphi 0, %s117
      %s132 = sphi 0, %s118
      %s136 = sphi 0, %s136
      %s138 = sphi 0, %s136
      %s139 = sphi 0, %s138
      %s153 = sphi 0, %s139
      %s157 = sphi 0, %s157
      %s159 = sphi 0, %s157
      %s160 = sphi 0, %s159
      %s174 = sphi 0, %s160
      %s178 = sphi 0, %s178
      %s180 = sphi 0, %s178
      %s181 = sphi 0, %s180
      %s195 = sphi 0, %s181
      %s199 = sphi 0, %s199
      %s201 = sphi 0, %s199
      %s202 = sphi 0, %s201
      %s216 = sphi 0, %s202
      %s222 = sphi 0, %s224
      %s225 = sphi 0, %s222
      %s226 = sphi 0, %s225
      %s242 = sphi 0, %s226
    $region4: #{one_conv_forward.1} parent=1 // loop_header_branch
      %21 = sbr.rel (%p19) target = $region8
    $region5: #{one_conv_forward.1} parent=1 // loop_body
      %s23 = ssub.s32 %s18, 1
      %s24 = ssub.s32 %s18, 2
      %s25 = sadd.s32 %s18, 1
      %s26 = ssub.s32 %s18, %s25
      %p27 = scmp.eq.s32.totalorder %s26, 0
      %s29 = sadd.s32 %s28, 1
      %s30 = scalar_select %p27, %s28, %s29
      %p33 = pneg %p27
      %p34 = scmp.eq.s32.totalorder %s18, 1
      %p35 = por %p33, %p34
      %p36 = scmp.ne.s32.totalorder %s28, %s31
      %p37 = scmp.eq.s32.totalorder %s18, 0
      %p38 = por %p36, %p37
      %p39 = scmp.ne.s32.totalorder %s28, %s31
      %p40 = scmp.eq.s32.totalorder %s23, 1
      %p41 = por %p39, %p40
      %p42 = scmp.ne.s32.totalorder %s31, %s32
      %p43 = scmp.eq.s32.totalorder %s23, 0
      %p44 = por %p42, %p43
      %p45 = scmp.ne.s32.totalorder %s31, %s32
      %p46 = scmp.eq.s32.totalorder %s24, 1
      %p47 = por %p45, %p46
      %p49 = scmp.ne.s32.totalorder %s32, %s48
      %p50 = scmp.eq.s32.totalorder %s24, 0
      %p51 = por %p49, %p50
      %s53 = sadd.s32 %s52, 1
      %p56 = scmp.eq.s32.totalorder %s18, 1
      %p57 = scmp.ne.s32.totalorder %s52, %s54
      %p58 = scmp.eq.s32.totalorder %s18, 0
      %p59 = por %p57, %p58
      %p60 = scmp.ne.s32.totalorder %s52, %s54
      %p61 = scmp.eq.s32.totalorder %s23, 1
      %p62 = por %p60, %p61
      %p63 = scmp.ne.s32.totalorder %s54, %s55
      %p64 = scmp.eq.s32.totalorder %s23, 0
      %p65 = por %p63, %p64
      %p66 = scmp.ne.s32.totalorder %s54, %s55
      %p67 = scmp.eq.s32.totalorder %s24, 1
      %p68 = por %p66, %p67
      %p70 = scmp.ne.s32.totalorder %s55, %s69
      %p71 = scmp.eq.s32.totalorder %s24, 0
      %p72 = por %p70, %p71
      %s74 = sadd.s32 %s73, 1
      %p77 = scmp.eq.s32.totalorder %s18, 1
      %p78 = scmp.ne.s32.totalorder %s73, %s75
      %p79 = scmp.eq.s32.totalorder %s18, 0
      %p80 = por %p78, %p79
      %p81 = scmp.ne.s32.totalorder %s73, %s75
      %p82 = scmp.eq.s32.totalorder %s23, 1
      %p83 = por %p81, %p82
      %p84 = scmp.ne.s32.totalorder %s75, %s76
      %p85 = scmp.eq.s32.totalorder %s23, 0
      %p86 = por %p84, %p85
      %p87 = scmp.ne.s32.totalorder %s75, %s76
      %p88 = scmp.eq.s32.totalorder %s24, 1
      %p89 = por %p87, %p88
      %p91 = scmp.ne.s32.totalorder %s76, %s90
      %p92 = scmp.eq.s32.totalorder %s24, 0
      %p93 = por %p91, %p92
      %s95 = sadd.s32 %s94, 1
      %p98 = scmp.eq.s32.totalorder %s18, 1
      %p99 = scmp.ne.s32.totalorder %s94, %s96
      %p100 = scmp.eq.s32.totalorder %s18, 0
      %p101 = por %p99, %p100
      %p102 = scmp.ne.s32.totalorder %s94, %s96
      %p103 = scmp.eq.s32.totalorder %s23, 1
      %p104 = por %p102, %p103
      %p105 = scmp.ne.s32.totalorder %s96, %s97
      %p106 = scmp.eq.s32.totalorder %s23, 0
      %p107 = por %p105, %p106
      %p108 = scmp.ne.s32.totalorder %s96, %s97
      %p109 = scmp.eq.s32.totalorder %s24, 1
      %p110 = por %p108, %p109
      %p112 = scmp.ne.s32.totalorder %s97, %s111
      %p113 = scmp.eq.s32.totalorder %s24, 0
      %p114 = por %p112, %p113
      %s116 = sadd.s32 %s115, 1
      %p119 = scmp.eq.s32.totalorder %s18, 1
      %p120 = scmp.ne.s32.totalorder %s115, %s117
      %p121 = scmp.eq.s32.totalorder %s18, 0
      %p122 = por %p120, %p121
      %p123 = scmp.ne.s32.totalorder %s115, %s117
      %p124 = scmp.eq.s32.totalorder %s23, 1
      %p125 = por %p123, %p124
      %p126 = scmp.ne.s32.totalorder %s117, %s118
      %p127 = scmp.eq.s32.totalorder %s23, 0
      %p128 = por %p126, %p127
      %p129 = scmp.ne.s32.totalorder %s117, %s118
      %p130 = scmp.eq.s32.totalorder %s24, 1
      %p131 = por %p129, %p130
      %p133 = scmp.ne.s32.totalorder %s118, %s132
      %p134 = scmp.eq.s32.totalorder %s24, 0
      %p135 = por %p133, %p134
      %s137 = sadd.s32 %s136, 1
      %p140 = scmp.eq.s32.totalorder %s18, 1
      %p141 = scmp.ne.s32.totalorder %s136, %s138
      %p142 = scmp.eq.s32.totalorder %s18, 0
      %p143 = por %p141, %p142
      %p144 = scmp.ne.s32.totalorder %s136, %s138
      %p145 = scmp.eq.s32.totalorder %s23, 1
      %p146 = por %p144, %p145
      %p147 = scmp.ne.s32.totalorder %s138, %s139
      %p148 = scmp.eq.s32.totalorder %s23, 0
      %p149 = por %p147, %p148
      %p150 = scmp.ne.s32.totalorder %s138, %s139
      %p151 = scmp.eq.s32.totalorder %s24, 1
      %p152 = por %p150, %p151
      %p154 = scmp.ne.s32.totalorder %s139, %s153
      %p155 = scmp.eq.s32.totalorder %s24, 0
      %p156 = por %p154, %p155
      %s158 = sadd.s32 %s157, 1
      %p161 = scmp.eq.s32.totalorder %s18, 1
      %p162 = scmp.ne.s32.totalorder %s157, %s159
      %p163 = scmp.eq.s32.totalorder %s18, 0
      %p164 = por %p162, %p163
      %p165 = scmp.ne.s32.totalorder %s157, %s159
      %p166 = scmp.eq.s32.totalorder %s23, 1
      %p167 = por %p165, %p166
      %p168 = scmp.ne.s32.totalorder %s159, %s160
      %p169 = scmp.eq.s32.totalorder %s23, 0
      %p170 = por %p168, %p169
      %p171 = scmp.ne.s32.totalorder %s159, %s160
      %p172 = scmp.eq.s32.totalorder %s24, 1
      %p173 = por %p171, %p172
      %p175 = scmp.ne.s32.totalorder %s160, %s174
      %p176 = scmp.eq.s32.totalorder %s24, 0
      %p177 = por %p175, %p176
      %s179 = sadd.s32 %s178, 1
      %p182 = scmp.eq.s32.totalorder %s18, 1
      %p183 = scmp.ne.s32.totalorder %s178, %s180
      %p184 = scmp.eq.s32.totalorder %s18, 0
      %p185 = por %p183, %p184
      %p186 = scmp.ne.s32.totalorder %s178, %s180
      %p187 = scmp.eq.s32.totalorder %s23, 1
      %p188 = por %p186, %p187
      %p189 = scmp.ne.s32.totalorder %s180, %s181
      %p190 = scmp.eq.s32.totalorder %s23, 0
      %p191 = por %p189, %p190
      %p192 = scmp.ne.s32.totalorder %s180, %s181
      %p193 = scmp.eq.s32.totalorder %s24, 1
      %p194 = por %p192, %p193
      %p196 = scmp.ne.s32.totalorder %s181, %s195
      %p197 = scmp.eq.s32.totalorder %s24, 0
      %p198 = por %p196, %p197
      %s200 = sadd.s32 %s199, 1
      %p203 = scmp.eq.s32.totalorder %s18, 1
      %p204 = scmp.ne.s32.totalorder %s199, %s201
      %p205 = scmp.eq.s32.totalorder %s18, 0
      %p206 = por %p204, %p205
      %p207 = scmp.ne.s32.totalorder %s199, %s201
      %p208 = scmp.eq.s32.totalorder %s23, 1
      %p209 = por %p207, %p208
      %p210 = scmp.ne.s32.totalorder %s201, %s202
      %p211 = scmp.eq.s32.totalorder %s23, 0
      %p212 = por %p210, %p211
      %p213 = scmp.ne.s32.totalorder %s201, %s202
      %p214 = scmp.eq.s32.totalorder %s24, 1
      %p215 = por %p213, %p214
      %p217 = scmp.ne.s32.totalorder %s202, %s216
      %p218 = scmp.eq.s32.totalorder %s24, 0
      %p219 = por %p217, %p218
      %s220 = ssub.s32 %s18, %s25
      %p221 = scmp.eq.s32.totalorder %s220, 0
      %s223 = sadd.s32 %s222, 1
      %s224 = scalar_select %p221, %s222, %s223
      %p227 = pneg %p221
      %p228 = scmp.eq.s32.totalorder %s18, 1
      %p229 = por %p227, %p228
      %p230 = scmp.ne.s32.totalorder %s222, %s225
      %p231 = scmp.eq.s32.totalorder %s18, 0
      %p232 = por %p230, %p231
      %p233 = scmp.ne.s32.totalorder %s222, %s225
      %p234 = scmp.eq.s32.totalorder %s23, 1
      %p235 = por %p233, %p234
      %p236 = scmp.ne.s32.totalorder %s225, %s226
      %p237 = scmp.eq.s32.totalorder %s23, 0
      %p238 = por %p236, %p237
      %p239 = scmp.ne.s32.totalorder %s225, %s226
      %p240 = scmp.eq.s32.totalorder %s24, 1
      %p241 = por %p239, %p240
      %p243 = scmp.ne.s32.totalorder %s226, %s242
      %p244 = scmp.eq.s32.totalorder %s24, 0
      %p245 = por %p243, %p244
      %p246 = scmp.le.s32.totalorder 1, %s18
      %p247 = scmp.lt.s32.totalorder %s18, 3
      %p248 = pnand %p246, %p247
      %p249 = pneg %p248
      // Predicated region
      $region9: #{one_conv_forward.1} parent=5 // pred_check
        _
      $region10: #{one_conv_forward.1} parent=5 // pred_check_branch
        %251 = sbr.rel (%p248) target = $region12
      $region11: #{one_conv_forward.1} parent=5 // pred_region
        %s252 = ssub.s32 %s18, 1
        // Predicated region
        $region13: #{one_conv_forward.1} parent=11 // pred_check
          %p253 = pneg %p65
        $region14: #{one_conv_forward.1} parent=11 // pred_check_branch
          %255 = sbr.rel (%p253) target = $region16
        $region15: #{one_conv_forward.1} parent=11 // pred_region
          _
        $region16: #{one_conv_forward.1} parent=11 // pred_fallthru
          _
        // Predicated region
        $region17: #{one_conv_forward.1} parent=11 // pred_check
          %p256 = pneg %p86
        $region18: #{one_conv_forward.1} parent=11 // pred_check_branch
          %258 = sbr.rel (%p256) target = $region20
        $region19: #{one_conv_forward.1} parent=11 // pred_region
          _
        $region20: #{one_conv_forward.1} parent=11 // pred_fallthru
          _
        // Predicated region
        $region21: #{one_conv_forward.1} parent=11 // pred_check
          %p259 = pneg %p107
        $region22: #{one_conv_forward.1} parent=11 // pred_check_branch
          %261 = sbr.rel (%p259) target = $region24
        $region23: #{one_conv_forward.1} parent=11 // pred_region
          _
        $region24: #{one_conv_forward.1} parent=11 // pred_fallthru
          _
        // Predicated region
        $region25: #{one_conv_forward.1} parent=11 // pred_check
          %p262 = pneg %p128
        $region26: #{one_conv_forward.1} parent=11 // pred_check_branch
          %264 = sbr.rel (%p262) target = $region28
        $region27: #{one_conv_forward.1} parent=11 // pred_region
          _
        $region28: #{one_conv_forward.1} parent=11 // pred_fallthru
          _
        // Predicated region
        $region29: #{one_conv_forward.1} parent=11 // pred_check
          %p265 = pneg %p149
        $region30: #{one_conv_forward.1} parent=11 // pred_check_branch
          %267 = sbr.rel (%p265) target = $region32
        $region31: #{one_conv_forward.1} parent=11 // pred_region
          _
        $region32: #{one_conv_forward.1} parent=11 // pred_fallthru
          _
        // Predicated region
        $region33: #{one_conv_forward.1} parent=11 // pred_check
          %p268 = pneg %p170
        $region34: #{one_conv_forward.1} parent=11 // pred_check_branch
          %270 = sbr.rel (%p268) target = $region36
        $region35: #{one_conv_forward.1} parent=11 // pred_region
          _
        $region36: #{one_conv_forward.1} parent=11 // pred_fallthru
          _
        // Predicated region
        $region37: #{one_conv_forward.1} parent=11 // pred_check
          %p271 = pneg %p191
        $region38: #{one_conv_forward.1} parent=11 // pred_check_branch
          %273 = sbr.rel (%p271) target = $region40
        $region39: #{one_conv_forward.1} parent=11 // pred_region
          _
        $region40: #{one_conv_forward.1} parent=11 // pred_fallthru
          _
        // Predicated region
        $region41: #{one_conv_forward.1} parent=11 // pred_check
          %p274 = pneg %p212
        $region42: #{one_conv_forward.1} parent=11 // pred_check_branch
          %276 = sbr.rel (%p274) target = $region44
        $region43: #{one_conv_forward.1} parent=11 // pred_region
          _
        $region44: #{one_conv_forward.1} parent=11 // pred_fallthru
          _
      $region12: #{one_conv_forward.1} parent=5 // pred_fallthru
        _
      %p277 = scmp.lt.s32.totalorder %s18, 2
      // Predicated region
      $region45: #{one_conv_forward.1} parent=5 // pred_check
        %p278 = pneg %p277
      $region46: #{one_conv_forward.1} parent=5 // pred_check_branch
        %280 = sbr.rel (%p278) target = $region48
      $region47: #{one_conv_forward.1} parent=5 // pred_region
        // Predicated region
        $region49: #{one_conv_forward.1} parent=47 // pred_check
          %p281 = pneg %p38
        $region50: #{one_conv_forward.1} parent=47 // pred_check_branch
          %283 = sbr.rel (%p281) target = $region52
        $region51: #{one_conv_forward.1} parent=47 // pred_region
          %p284 = scmp.lt.s32.totalorder %s18, 1
          %s285 = scalar_select %p284, %s18, 1
          %s286 = smul.addr %s285, 29
          %s287 = smul.addr %s286, 8
          %s288 = scalar_lea.vmem %s0, %s287
        $region52: #{one_conv_forward.1} parent=47 // pred_fallthru
          _
      $region48: #{one_conv_forward.1} parent=5 // pred_fallthru
        _
      %p289 = scmp.le.s32.totalorder 1, %s18
      %p290 = scmp.lt.s32.totalorder %s18, 3
      %p291 = pnand %p289, %p290
      %p292 = pneg %p291
      // Predicated region
      $region53: #{one_conv_forward.1} parent=5 // pred_check
        _
      $region54: #{one_conv_forward.1} parent=5 // pred_check_branch
        %294 = sbr.rel (%p291) target = $region56
      $region55: #{one_conv_forward.1} parent=5 // pred_region
        %s295 = ssub.s32 %s18, 1
        %p296 = scmp.lt.s32.totalorder %s23, 1
        %s297 = scalar_select %p296, %s23, 1
        %s298 = smul.addr %s297, 29
        %s299 = smul.addr %s298, 8
        %s300 = scalar_lea.vmem %s0, %s299
        %p301 = pneg %p44
        %p302 = pneg %p41
        %p303 = pneg %p65
        %p304 = pneg %p62
        %p305 = pneg %p86
        %p306 = pneg %p83
        %p307 = pneg %p107
        %p308 = pneg %p104
        %p309 = pneg %p128
        %p310 = pneg %p125
        %p311 = pneg %p149
        %p312 = pneg %p146
        %p313 = pneg %p170
        %p314 = pneg %p167
        %p315 = pneg %p191
        %p316 = pneg %p188
        %p317 = pneg %p212
        %p318 = pneg %p209
        %p319 = pneg %p238
        %p320 = pneg %p235
        %s321 = sand.u32 %s225, 1
        %s322 = scalar_lea.sflag [#allocation3], %s321
        %s323 = sand.u32 %s225, 1
        %s324 = scalar_lea.vmem [#allocation2], %s323
        %p325 = scmp.lt.s32.totalorder %s23, 1
        %s326 = scalar_select %p325, %s23, 1
        %s327 = smul.addr %s326, 29
        %s328 = smul.addr %s327, 8
        %s329 = scalar_lea.vmem %s0, %s328
        %v330 = vld [vmem:[%s329] sm:$0xff]
        %v331 = vld [vmem:[%s329 + $0x8] sm:$0xff]
        %v332 = vld [vmem:[%s329 + $0x10] sm:$0xff]
        %v333 = vld [vmem:[%s329 + $0x18] sm:$0xff]
        %v334 = vld [vmem:[%s329 + $0x20] sm:$0xff]
        %v335 = vld [vmem:[%s329 + $0x28] sm:$0xff]
        %v336 = vld [vmem:[%s329 + $0x30] sm:$0xff]
        %v337 = vld [vmem:[%s329 + $0x38] sm:$0xff]
        %v338 = vld [vmem:[%s329 + $0x40] sm:$0xff]
        %v339 = vld [vmem:[%s329 + $0x48] sm:$0xff]
        %v340 = vld [vmem:[%s329 + $0x50] sm:$0xff]
        %v341 = vld [vmem:[%s329 + $0x58] sm:$0xff]
        %v342 = vld [vmem:[%s329 + $0x60] sm:$0xff]
        %v343 = vld [vmem:[%s329 + $0x68] sm:$0xff]
        %v344 = vld [vmem:[%s329 + $0x70] sm:$0xff]
        %v345 = vld [vmem:[%s329 + $0x78] sm:$0xff]
        %v346 = vld [vmem:[%s329 + $0x80] sm:$0xff]
        %v347 = vld [vmem:[%s329 + $0x88] sm:$0xff]
        %v348 = vld [vmem:[%s329 + $0x90] sm:$0xff]
        %v349 = vld [vmem:[%s329 + $0x98] sm:$0xff]
        %v350 = vld [vmem:[%s329 + $0xa0] sm:$0xff]
        %v351 = vld [vmem:[%s329 + $0xa8] sm:$0xff]
        %v352 = vld [vmem:[%s329 + $0xb0] sm:$0xff]
        %v353 = vld [vmem:[%s329 + $0xb8] sm:$0xff]
        %v354 = vld [vmem:[%s329 + $0xc0] sm:$0xff]
        %v355 = vld [vmem:[%s329 + $0xc8] sm:$0xff]
        %v356 = vld [vmem:[%s329 + $0xd0] sm:$0xff]
        %v357 = vld [vmem:[%s329 + $0xd8] sm:$0xff]
        %v358 = vld [vmem:[%s329 + $0xe0] sm:$0x1]
        %v359 = vld [vmem:[%s1] sm:$0xff]
        %v360 = vld [vmem:[%s1 + $0x8] sm:$0xff]
        %v361 = vld [vmem:[%s1 + $0x10] sm:$0xff]
        %v362 = vld [vmem:[%s1 + $0x18] sm:$0xff]
        %v363 = vld [vmem:[%s1 + $0x20] sm:$0xff]
        %v364 = vld [vmem:[%s1 + $0x28] sm:$0xff]
        %v365 = vld [vmem:[%s1 + $0x30] sm:$0xff]
        %v366 = vld [vmem:[%s1 + $0x38] sm:$0xff]
        %v367 = vld [vmem:[%s1 + $0x40] sm:$0xff]
        %v368 = vld [vmem:[%s1 + $0x48] sm:$0xff]
        %v369 = vld [vmem:[%s1 + $0x50] sm:$0xff]
        %v370 = vld [vmem:[%s1 + $0x58] sm:$0xff]
        %v371 = vld [vmem:[%s1 + $0x60] sm:$0xff]
        %v372 = vld [vmem:[%s1 + $0x68] sm:$0xff]
        %v373 = vld [vmem:[%s1 + $0x70] sm:$0xff]
        %v374 = vld [vmem:[%s1 + $0x78] sm:$0xff]
        %v375 = vld [vmem:[%s2] sm:$0x1]
        %v377 = vlaneseq
        %v378 = vshrl.u32 %v377, 7
        %v379 = vsub.s32 0, %v378
        %v380 = vrot.slane %v375, %v379
        %382 = vmatprep.subr.mxu0 0.0
        %383 = vmatpush1.msra.mxu0 %v374
        %384 = vmatprep.subr.mxu0 0.0
        %385 = vmatpush1.msra.mxu0 %v373
        %386 = vmatprep.subr.mxu0 0.0
        %387 = vmatpush1.msra.mxu0 %v372
        %388 = vmatprep.subr.mxu0 0.0
        %389 = vmatpush1.msra.mxu0 %v371
        %390 = vmatprep.subr.mxu0 0.0
        %391 = vmatpush1.msra.mxu0 %v370
        %392 = vmatprep.subr.mxu0 0.0
        %393 = vmatpush1.msra.mxu0 %v369
        %394 = vmatprep.subr.mxu0 0.0
        %395 = vmatpush1.msra.mxu0 %v368
        %396 = vmatprep.subr.mxu0 0.0
        %397 = vmatpush1.msra.mxu0 %v367
        %398 = vmatprep.subr.mxu0 0.0
        %399 = vmatpush1.msra.mxu0 %v366
        %400 = vmatprep.subr.mxu0 0.0
        %401 = vmatpush1.msra.mxu0 %v365
        %402 = vmatprep.subr.mxu0 0.0
        %403 = vmatpush1.msra.mxu0 %v364
        %404 = vmatprep.subr.mxu0 0.0
        %405 = vmatpush1.msra.mxu0 %v363
        %406 = vmatprep.subr.mxu0 0.0
        %407 = vmatpush1.msra.mxu0 %v362
        %408 = vmatprep.subr.mxu0 0.0
        %409 = vmatpush1.msra.mxu0 %v361
        %410 = vmatprep.subr.mxu0 0.0
        %411 = vmatpush1.msra.mxu0 %v360
        %412 = vmatprep.subr.mxu0 0.0
        %413 = vmatpush1.msra.mxu0 %v359
        %414 = vmatprep.subr.mxu0 0.0
        %415 = vmatpush2.msra.mxu0 0.0
        %416 = vmatprep.subr.mxu0 0.0
        %417 = vmatpush2.msra.mxu0 0.0
        %418 = vmatprep.subr.mxu0 0.0
        %419 = vmatpush2.msra.mxu0 0.0
        %420 = vmatprep.subr.mxu0 0.0
        %421 = vmatpush2.msra.mxu0 0.0
        %422 = vmatprep.subr.mxu0 0.0
        %423 = vmatpush2.msra.mxu0 0.0
        %424 = vmatprep.subr.mxu0 0.0
        %425 = vmatpush2.msra.mxu0 0.0
        %426 = vmatprep.subr.mxu0 0.0
        %427 = vmatpush2.msra.mxu0 0.0
        %428 = vmatprep.subr.mxu0 0.0
        %429 = vmatpush2.msra.mxu0 0.0
        %430 = vmatprep.subr.mxu0 0.0
        %431 = vmatpush2.msra.mxu0 0.0
        %432 = vmatprep.subr.mxu0 0.0
        %433 = vmatpush2.msra.mxu0 0.0
        %434 = vmatprep.subr.mxu0 0.0
        %435 = vmatpush2.msra.mxu0 0.0
        %436 = vmatprep.subr.mxu0 0.0
        %437 = vmatpush2.msra.mxu0 0.0
        %438 = vmatprep.subr.mxu0 0.0
        %439 = vmatpush2.msra.mxu0 0.0
        %440 = vmatprep.subr.mxu0 0.0
        %441 = vmatpush2.msra.mxu0 0.0
        %442 = vmatprep.subr.mxu0 0.0
        %443 = vmatpush2.msra.mxu0 0.0
        %444 = vmatprep.subr.mxu0 0.0
        %445 = vmatpush2.msra.mxu0 0.0
        %446 = vmatprep.mubr.f32.mxu0 0.0
        %447 = vmatmul.mubr.f32.gmra.mxu0 %v330
        %v448 = vpop.f32.mrf.mxu0
        %v449 = vadd.f32 %v380, %v448
        %v450 = vpop.f32.mrf.mxu0
        %451 = vmatprep.mubr.f32.mxu0 0.0
        %452 = vmatmul.mubr.f32.gmra.mxu0 %v331
        %v453 = vpop.f32.mrf.mxu0
        %v454 = vadd.f32 %v380, %v453
        %v455 = vpop.f32.mrf.mxu0
        %456 = vmatprep.mubr.f32.mxu0 0.0
        %457 = vmatmul.mubr.f32.gmra.mxu0 %v332
        %v458 = vpop.f32.mrf.mxu0
        %v459 = vadd.f32 %v380, %v458
        %v460 = vpop.f32.mrf.mxu0
        %461 = vmatprep.mubr.f32.mxu0 0.0
        %462 = vmatmul.mubr.f32.gmra.mxu0 %v333
        %v463 = vpop.f32.mrf.mxu0
        %v464 = vadd.f32 %v380, %v463
        %v465 = vpop.f32.mrf.mxu0
        %466 = vmatprep.mubr.f32.mxu0 0.0
        %467 = vmatmul.mubr.f32.gmra.mxu0 %v334
        %v468 = vpop.f32.mrf.mxu0
        %v469 = vadd.f32 %v380, %v468
        %v470 = vpop.f32.mrf.mxu0
        %471 = vmatprep.mubr.f32.mxu0 0.0
        %472 = vmatmul.mubr.f32.gmra.mxu0 %v335
        %v473 = vpop.f32.mrf.mxu0
        %v474 = vadd.f32 %v380, %v473
        %v475 = vpop.f32.mrf.mxu0
        %476 = vmatprep.mubr.f32.mxu0 0.0
        %477 = vmatmul.mubr.f32.gmra.mxu0 %v336
        %v478 = vpop.f32.mrf.mxu0
        %v479 = vadd.f32 %v380, %v478
        %v480 = vpop.f32.mrf.mxu0
        %481 = vmatprep.mubr.f32.mxu0 0.0
        %482 = vmatmul.mubr.f32.gmra.mxu0 %v337
        %v483 = vpop.f32.mrf.mxu0
        %v484 = vadd.f32 %v380, %v483
        %v485 = vpop.f32.mrf.mxu0
        %486 = vmatprep.mubr.f32.mxu0 0.0
        %487 = vmatmul.mubr.f32.gmra.mxu0 %v338
        %v488 = vpop.f32.mrf.mxu0
        %v489 = vadd.f32 %v380, %v488
        %v490 = vpop.f32.mrf.mxu0
        %491 = vmatprep.mubr.f32.mxu0 0.0
        %492 = vmatmul.mubr.f32.gmra.mxu0 %v339
        %v493 = vpop.f32.mrf.mxu0
        %v494 = vadd.f32 %v380, %v493
        %v495 = vpop.f32.mrf.mxu0
        %496 = vmatprep.mubr.f32.mxu0 0.0
        %497 = vmatmul.mubr.f32.gmra.mxu0 %v340
        %v498 = vpop.f32.mrf.mxu0
        %v499 = vadd.f32 %v380, %v498
        %v500 = vpop.f32.mrf.mxu0
        %501 = vmatprep.mubr.f32.mxu0 0.0
        %502 = vmatmul.mubr.f32.gmra.mxu0 %v341
        %v503 = vpop.f32.mrf.mxu0
        %v504 = vadd.f32 %v380, %v503
        %v505 = vpop.f32.mrf.mxu0
        %506 = vmatprep.mubr.f32.mxu0 0.0
        %507 = vmatmul.mubr.f32.gmra.mxu0 %v342
        %v508 = vpop.f32.mrf.mxu0
        %v509 = vadd.f32 %v380, %v508
        %v510 = vpop.f32.mrf.mxu0
        %511 = vmatprep.mubr.f32.mxu0 0.0
        %512 = vmatmul.mubr.f32.gmra.mxu0 %v343
        %v513 = vpop.f32.mrf.mxu0
        %v514 = vadd.f32 %v380, %v513
        %v515 = vpop.f32.mrf.mxu0
        %516 = vmatprep.mubr.f32.mxu0 0.0
        %517 = vmatmul.mubr.f32.gmra.mxu0 %v344
        %v518 = vpop.f32.mrf.mxu0
        %v519 = vadd.f32 %v380, %v518
        %v520 = vpop.f32.mrf.mxu0
        %521 = vmatprep.mubr.f32.mxu0 0.0
        %522 = vmatmul.mubr.f32.gmra.mxu0 %v345
        %v523 = vpop.f32.mrf.mxu0
        %v524 = vadd.f32 %v380, %v523
        %v525 = vpop.f32.mrf.mxu0
        %526 = vmatprep.mubr.f32.mxu0 0.0
        %527 = vmatmul.mubr.f32.gmra.mxu0 %v346
        %v528 = vpop.f32.mrf.mxu0
        %v529 = vadd.f32 %v380, %v528
        %v530 = vpop.f32.mrf.mxu0
        %531 = vmatprep.mubr.f32.mxu0 0.0
        %532 = vmatmul.mubr.f32.gmra.mxu0 %v347
        %v533 = vpop.f32.mrf.mxu0
        %v534 = vadd.f32 %v380, %v533
        %v535 = vpop.f32.mrf.mxu0
        %536 = vmatprep.mubr.f32.mxu0 0.0
        %537 = vmatmul.mubr.f32.gmra.mxu0 %v348
        %v538 = vpop.f32.mrf.mxu0
        %v539 = vadd.f32 %v380, %v538
        %v540 = vpop.f32.mrf.mxu0
        %541 = vmatprep.mubr.f32.mxu0 0.0
        %542 = vmatmul.mubr.f32.gmra.mxu0 %v349
        %v543 = vpop.f32.mrf.mxu0
        %v544 = vadd.f32 %v380, %v543
        %v545 = vpop.f32.mrf.mxu0
        %546 = vmatprep.mubr.f32.mxu0 0.0
        %547 = vmatmul.mubr.f32.gmra.mxu0 %v350
        %v548 = vpop.f32.mrf.mxu0
        %v549 = vadd.f32 %v380, %v548
        %v550 = vpop.f32.mrf.mxu0
        %551 = vmatprep.mubr.f32.mxu0 0.0
        %552 = vmatmul.mubr.f32.gmra.mxu0 %v351
        %v553 = vpop.f32.mrf.mxu0
        %v554 = vadd.f32 %v380, %v553
        %v555 = vpop.f32.mrf.mxu0
        %556 = vmatprep.mubr.f32.mxu0 0.0
        %557 = vmatmul.mubr.f32.gmra.mxu0 %v352
        %v558 = vpop.f32.mrf.mxu0
        %v559 = vadd.f32 %v380, %v558
        %v560 = vpop.f32.mrf.mxu0
        %561 = vmatprep.mubr.f32.mxu0 0.0
        %562 = vmatmul.mubr.f32.gmra.mxu0 %v353
        %v563 = vpop.f32.mrf.mxu0
        %v564 = vadd.f32 %v380, %v563
        %v565 = vpop.f32.mrf.mxu0
        %566 = vmatprep.mubr.f32.mxu0 0.0
        %567 = vmatmul.mubr.f32.gmra.mxu0 %v354
        %v568 = vpop.f32.mrf.mxu0
        %v569 = vadd.f32 %v380, %v568
        %v570 = vpop.f32.mrf.mxu0
        %571 = vmatprep.mubr.f32.mxu0 0.0
        %572 = vmatmul.mubr.f32.gmra.mxu0 %v355
        %v573 = vpop.f32.mrf.mxu0
        %v574 = vadd.f32 %v380, %v573
        %v575 = vpop.f32.mrf.mxu0
        %576 = vmatprep.mubr.f32.mxu0 0.0
        %577 = vmatmul.mubr.f32.gmra.mxu0 %v356
        %v578 = vpop.f32.mrf.mxu0
        %v579 = vadd.f32 %v380, %v578
        %v580 = vpop.f32.mrf.mxu0
        %581 = vmatprep.mubr.f32.mxu0 0.0
        %582 = vmatmul.mubr.f32.gmra.mxu0 %v357
        %v583 = vpop.f32.mrf.mxu0
        %v584 = vpop.f32.mrf.mxu0
        %585 = vmatprep.mubr.f32.mxu0 0.0
        %586 = vmatmul.mubr.f32.gmra.mxu0 %v358
        %v587 = vpop.f32.mrf.mxu0
        %v588 = vpop.f32.mrf.mxu0
        %589 = vdwg.mxu0
        %vm590 = vcmp.gt.f32.partialorder %v449, 0.0
        %vm591 = vcmp.gt.f32.partialorder %v454, 0.0
        %vm592 = vcmp.gt.f32.partialorder %v459, 0.0
        %vm593 = vcmp.gt.f32.partialorder %v464, 0.0
        %vm594 = vcmp.gt.f32.partialorder %v469, 0.0
        %vm595 = vcmp.gt.f32.partialorder %v474, 0.0
        %vm596 = vcmp.gt.f32.partialorder %v479, 0.0
        %vm597 = vcmp.gt.f32.partialorder %v484, 0.0
        %vm598 = vcmp.gt.f32.partialorder %v489, 0.0
        %vm599 = vcmp.gt.f32.partialorder %v494, 0.0
        %vm600 = vcmp.gt.f32.partialorder %v499, 0.0
        %vm601 = vcmp.gt.f32.partialorder %v504, 0.0
        %vm602 = vcmp.gt.f32.partialorder %v509, 0.0
        %vm603 = vcmp.gt.f32.partialorder %v514, 0.0
        %vm604 = vcmp.gt.f32.partialorder %v519, 0.0
        %vm605 = vcmp.gt.f32.partialorder %v524, 0.0
        %vm606 = vcmp.gt.f32.partialorder %v529, 0.0
        %vm607 = vcmp.gt.f32.partialorder %v534, 0.0
        %vm608 = vcmp.gt.f32.partialorder %v539, 0.0
        %vm609 = vcmp.gt.f32.partialorder %v544, 0.0
        %vm610 = vcmp.gt.f32.partialorder %v549, 0.0
        %vm611 = vcmp.gt.f32.partialorder %v554, 0.0
        %vm612 = vcmp.gt.f32.partialorder %v559, 0.0
        %vm613 = vcmp.gt.f32.partialorder %v564, 0.0
        %vm614 = vcmp.gt.f32.partialorder %v569, 0.0
        %vm615 = vcmp.gt.f32.partialorder %v574, 0.0
        %vm616 = vcmp.gt.f32.partialorder %v579, 0.0
        %v617 = vmul.f32 %v449, 0.01
        %v618 = vmul.f32 %v454, 0.01
        %v619 = vmul.f32 %v459, 0.01
        %v620 = vmul.f32 %v464, 0.01
        %v621 = vmul.f32 %v469, 0.01
        %v622 = vmul.f32 %v474, 0.01
        %v623 = vmul.f32 %v479, 0.01
        %v624 = vmul.f32 %v484, 0.01
        %v625 = vmul.f32 %v489, 0.01
        %v626 = vmul.f32 %v494, 0.01
        %v627 = vmul.f32 %v499, 0.01
        %v628 = vmul.f32 %v504, 0.01
        %v629 = vmul.f32 %v509, 0.01
        %v630 = vmul.f32 %v514, 0.01
        %v631 = vmul.f32 %v519, 0.01
        %v632 = vmul.f32 %v524, 0.01
        %v633 = vmul.f32 %v529, 0.01
        %v634 = vmul.f32 %v534, 0.01
        %v635 = vmul.f32 %v539, 0.01
        %v636 = vmul.f32 %v544, 0.01
        %v637 = vmul.f32 %v549, 0.01
        %v638 = vmul.f32 %v554, 0.01
        %v639 = vmul.f32 %v559, 0.01
        %v640 = vmul.f32 %v564, 0.01
        %v641 = vmul.f32 %v569, 0.01
        %v642 = vmul.f32 %v574, 0.01
        %v643 = vmul.f32 %v579, 0.01
        %v644 = vsel %vm590, %v449, %v617
        %v645 = vsel %vm591, %v454, %v618
        %v646 = vsel %vm592, %v459, %v619
        %v647 = vsel %vm593, %v464, %v620
        %v648 = vsel %vm594, %v469, %v621
        %v649 = vsel %vm595, %v474, %v622
        %v650 = vsel %vm596, %v479, %v623
        %v651 = vsel %vm597, %v484, %v624
        %v652 = vsel %vm598, %v489, %v625
        %v653 = vsel %vm599, %v494, %v626
        %v654 = vsel %vm600, %v499, %v627
        %v655 = vsel %vm601, %v504, %v628
        %v656 = vsel %vm602, %v509, %v629
        %v657 = vsel %vm603, %v514, %v630
        %v658 = vsel %vm604, %v519, %v631
        %v659 = vsel %vm605, %v524, %v632
        %v660 = vsel %vm606, %v529, %v633
        %v661 = vsel %vm607, %v534, %v634
        %v662 = vsel %vm608, %v539, %v635
        %v663 = vsel %vm609, %v544, %v636
        %v664 = vsel %vm610, %v549, %v637
        %v665 = vsel %vm611, %v554, %v638
        %v666 = vsel %vm612, %v559, %v639
        %v667 = vsel %vm613, %v564, %v640
        %v668 = vsel %vm614, %v569, %v641
        %v669 = vsel %vm615, %v574, %v642
        %v670 = vsel %vm616, %v579, %v643
        %vm674 = vcmask 1040384
        %v675 = vrot.slane %v645, 7
        %v676 = vrot.slane %v646, 7
        %v677 = vsel %vm674, %v675, %v676
        %v678 = vrot.slane %v647, 7
        %v679 = vsel %vm674, %v676, %v678
        %v682 = vmax.f32 %v644, %v677
        %v683 = vmax.f32 %v645, %v679
        %v685 = vrot.slane %v682, 1
        %v687 = vmax.f32 %v682, %v685
        %v689 = vrot.slane %v683, 1
        %v691 = vmax.f32 %v683, %v689
        %v695 = vrot.slane %v649, 7
        %v696 = vrot.slane %v650, 7
        %v697 = vsel %vm674, %v695, %v696
        %v698 = vrot.slane %v651, 7
        %v699 = vsel %vm674, %v696, %v698
        %v703 = vmax.f32 %v647, %v695
        %v704 = vmax.f32 %v648, %v697
        %v705 = vmax.f32 %v649, %v699
        %v707 = vrot.slane %v703, 1
        %v709 = vmax.f32 %v703, %v707
        %v711 = vrot.slane %v704, 1
        %v713 = vmax.f32 %v704, %v711
        %v715 = vrot.slane %v705, 1
        %v717 = vmax.f32 %v705, %v715
        %v721 = vrot.slane %v653, 7
        %v722 = vrot.slane %v654, 7
        %v723 = vsel %vm674, %v721, %v722
        %v724 = vrot.slane %v655, 7
        %v725 = vsel %vm674, %v722, %v724
        %v729 = vmax.f32 %v651, %v721
        %v730 = vmax.f32 %v652, %v723
        %v731 = vmax.f32 %v653, %v725
        %v733 = vrot.slane %v729, 1
        %v735 = vmax.f32 %v729, %v733
        %v737 = vrot.slane %v730, 1
        %v739 = vmax.f32 %v730, %v737
        %v741 = vrot.slane %v731, 1
        %v743 = vmax.f32 %v731, %v741
        %v746 = vrot.slane %v657, 7
        %v747 = vrot.slane %v658, 7
        %v748 = vsel %vm674, %v746, %v747
        %v751 = vmax.f32 %v655, %v746
        %v752 = vmax.f32 %v656, %v748
        %v754 = vrot.slane %v751, 1
        %v756 = vmax.f32 %v751, %v754
        %v758 = vrot.slane %v752, 1
        %v760 = vmax.f32 %v752, %v758
        %v764 = vrot.slane %v660, 7
        %v765 = vrot.slane %v661, 7
        %v766 = vsel %vm674, %v764, %v765
        %v767 = vrot.slane %v662, 7
        %v768 = vsel %vm674, %v765, %v767
        %v771 = vmax.f32 %v659, %v766
        %v772 = vmax.f32 %v660, %v768
        %v774 = vrot.slane %v771, 1
        %v776 = vmax.f32 %v771, %v774
        %v778 = vrot.slane %v772, 1
        %v780 = vmax.f32 %v772, %v778
        %v784 = vrot.slane %v664, 7
        %v785 = vrot.slane %v665, 7
        %v786 = vsel %vm674, %v784, %v785
        %v787 = vrot.slane %v666, 7
        %v788 = vsel %vm674, %v785, %v787
        %v792 = vmax.f32 %v662, %v784
        %v793 = vmax.f32 %v663, %v786
        %v794 = vmax.f32 %v664, %v788
        %v796 = vrot.slane %v792, 1
        %v798 = vmax.f32 %v792, %v796
        %v800 = vrot.slane %v793, 1
        %v802 = vmax.f32 %v793, %v800
        %v804 = vrot.slane %v794, 1
        %v806 = vmax.f32 %v794, %v804
        %v810 = vrot.slane %v668, 7
        %v811 = vrot.slane %v669, 7
        %v812 = vsel %vm674, %v810, %v811
        %v813 = vrot.slane %v670, 7
        %v814 = vsel %vm674, %v811, %v813
        %v818 = vmax.f32 %v666, %v810
        %v819 = vmax.f32 %v667, %v812
        %v820 = vmax.f32 %v668, %v814
        %v822 = vrot.slane %v818, 1
        %v824 = vmax.f32 %v818, %v822
        %v826 = vrot.slane %v819, 1
        %v828 = vmax.f32 %v819, %v826
        %v830 = vrot.slane %v820, 1
        %v832 = vmax.f32 %v820, %v830
        %v834 = vrot.slane %v687, 2
        %v836 = vrot.slane %v687, 4
        %v839 = vrot.slane %v709, 6
        %v842 = vrot.slane %v713, 2
        %v845 = vrot.slane %v735, 4
        %v847 = vrot.slane %v735, 6
        %v850 = vrot.slane %v691, 4
        %v851 = vrot.slane %v713, 6
        %v853 = vrot.slane %v739, 4
        %v854 = vrot.slane %v739, 6
        %v855 = vrot.slane %v691, 2
        %v857 = vrot.slane %v717, 2
        %v858 = vrot.slane %v735, 2
        %v860 = vrot.slane %v756, 6
        %v861 = vrot.slane %v756, 2
        %v863 = vrot.slane %v776, 4
        %v864 = vrot.slane %v776, 6
        %v865 = vrot.slane %v739, 2
        %v867 = vrot.slane %v760, 2
        %v869 = vrot.slane %v743, 4
        %v870 = vrot.slane %v760, 6
        %v872 = vrot.slane %v780, 4
        %v873 = vrot.slane %v780, 6
        %v874 = vrot.slane %v776, 2
        %v876 = vrot.slane %v798, 6
        %v878 = vrot.slane %v802, 2
        %v880 = vrot.slane %v824, 4
        %v881 = vrot.slane %v824, 6
        %v882 = vrot.slane %v802, 6
        %v884 = vrot.slane %v828, 4
        %v885 = vrot.slane %v828, 6
        %v886 = vrot.slane %v780, 2
        %v891 = vrot.slane %v806, 2
        %v895 = vrot.slane %v687, 3
        %v896 = vrot.slane %v834, 3
        %v897 = vrot.slane %v850, 3
        %v898 = vrot.slane %v851, 3
        %v899 = vrot.slane %v713, 3
        %v900 = vrot.slane %v842, 3
        %v901 = vrot.slane %v853, 3
        %v902 = vrot.slane %v854, 3
        %v903 = vrot.slane %v739, 3
        %v913 = vrot.slane %v691, 6
        %v914 = vrot.slane %v855, 6
        %v915 = vrot.slane %v850, 6
        %v916 = vrot.slane %v851, 6
        %v917 = vrot.slane %v717, 6
        %v918 = vrot.slane %v857, 6
        %v919 = vrot.slane %v853, 6
        %v920 = vrot.slane %v854, 6
        %v921 = vrot.slane %v743, 6
        %v931 = vrot.slane %v735, 1
        %v932 = vrot.slane %v858, 1
        %v933 = vrot.slane %v853, 1
        %v934 = vrot.slane %v860, 1
        %v935 = vrot.slane %v756, 1
        %v936 = vrot.slane %v861, 1
        %v937 = vrot.slane %v863, 1
        %v938 = vrot.slane %v864, 1
        %v939 = vrot.slane %v776, 1
        %v949 = vrot.slane %v865, 4
        %v950 = vrot.slane %v853, 4
        %v951 = vrot.slane %v860, 4
        %v952 = vrot.slane %v760, 4
        %v953 = vrot.slane %v867, 4
        %v954 = vrot.slane %v863, 4
        %v955 = vrot.slane %v864, 4
        %v964 = vrot.slane %v739, 7
        %v965 = vrot.slane %v865, 7
        %v966 = vrot.slane %v869, 7
        %v967 = vrot.slane %v870, 7
        %v968 = vrot.slane %v760, 7
        %v969 = vrot.slane %v867, 7
        %v970 = vrot.slane %v872, 7
        %v971 = vrot.slane %v873, 7
        %v972 = vrot.slane %v780, 7
        %v982 = vrot.slane %v874, 2
        %v983 = vrot.slane %v863, 2
        %v984 = vrot.slane %v876, 2
        %v985 = vrot.slane %v878, 2
        %v986 = vrot.slane %v880, 2
        %v987 = vrot.slane %v881, 2
        %v988 = vrot.slane %v828, 2
        %v998 = vrot.slane %v776, 5
        %v999 = vrot.slane %v874, 5
        %v1000 = vrot.slane %v872, 5
        %v1001 = vrot.slane %v882, 5
        %v1002 = vrot.slane %v802, 5
        %v1003 = vrot.slane %v878, 5
        %v1004 = vrot.slane %v884, 5
        %v1005 = vrot.slane %v885, 5
        %v1006 = vrot.slane %v828, 5
        %v1016 = vsel %vm674, %v687, %v895
        %v1017 = vsel %vm674, %v834, %v896
        %v1018 = vsel %vm674, %v836, %v897
        %v1019 = vsel %vm674, %v839, %v898
        %v1020 = vsel %vm674, %v713, %v899
        %v1021 = vsel %vm674, %v842, %v900
        %v1022 = vsel %vm674, %v845, %v901
        %v1023 = vsel %vm674, %v847, %v902
        %v1024 = vsel %vm674, %v739, %v903
        %vm1025 = vcmask 1041408
        %v1026 = vsel %vm1025, %v1016, %v913
        %v1027 = vsel %vm1025, %v1017, %v914
        %v1028 = vsel %vm1025, %v1018, %v915
        %v1029 = vsel %vm1025, %v1019, %v916
        %v1030 = vsel %vm1025, %v1020, %v917
        %v1031 = vsel %vm1025, %v1021, %v918
        %v1032 = vsel %vm1025, %v1022, %v919
        %v1033 = vsel %vm1025, %v1023, %v920
        %v1034 = vsel %vm1025, %v1024, %v921
        %vm1035 = vcmask 1042432
        %v1036 = vsel %vm1035, %v1026, %v931
        %v1037 = vsel %vm1035, %v1027, %v932
        %v1038 = vsel %vm1035, %v1028, %v933
        %v1039 = vsel %vm1035, %v1029, %v934
        %v1040 = vsel %vm1035, %v1030, %v935
        %v1041 = vsel %vm1035, %v1031, %v936
        %v1042 = vsel %vm1035, %v1032, %v937
        %v1043 = vsel %vm1035, %v1033, %v938
        %v1044 = vsel %vm1035, %v1034, %v939
        %vm1045 = vcmask 1043456
        %v1046 = vsel %vm1045, %v1036, %v853
        %v1047 = vsel %vm1045, %v1037, %v949
        %v1048 = vsel %vm1045, %v1038, %v950
        %v1049 = vsel %vm1045, %v1039, %v951
        %v1050 = vsel %vm1045, %v1040, %v952
        %v1051 = vsel %vm1045, %v1041, %v953
        %v1052 = vsel %vm1045, %v1042, %v954
        %v1053 = vsel %vm1045, %v1043, %v955
        %v1054 = vsel %vm1045, %v1044, %v872
        %vm1055 = vcmask 1044480
        %v1056 = vsel %vm1055, %v1046, %v964
        %v1057 = vsel %vm1055, %v1047, %v965
        %v1058 = vsel %vm1055, %v1048, %v966
        %v1059 = vsel %vm1055, %v1049, %v967
        %v1060 = vsel %vm1055, %v1050, %v968
        %v1061 = vsel %vm1055, %v1051, %v969
        %v1062 = vsel %vm1055, %v1052, %v970
        %v1063 = vsel %vm1055, %v1053, %v971
        %v1064 = vsel %vm1055, %v1054, %v972
        %vm1065 = vcmask 1045504
        %v1066 = vsel %vm1065, %v1056, %v874
        %v1067 = vsel %vm1065, %v1057, %v982
        %v1068 = vsel %vm1065, %v1058, %v983
        %v1069 = vsel %vm1065, %v1059, %v984
        %v1070 = vsel %vm1065, %v1060, %v878
        %v1071 = vsel %vm1065, %v1061, %v985
        %v1072 = vsel %vm1065, %v1062, %v986
        %v1073 = vsel %vm1065, %v1063, %v987
        %v1074 = vsel %vm1065, %v1064, %v988
        %vm1075 = vcmask 1046528
        %v1076 = vsel %vm1075, %v1066, %v998
        %v1077 = vsel %vm1075, %v1067, %v999
        %v1078 = vsel %vm1075, %v1068, %v1000
        %v1079 = vsel %vm1075, %v1069, %v1001
        %v1080 = vsel %vm1075, %v1070, %v1002
        %v1081 = vsel %vm1075, %v1071, %v1003
        %v1082 = vsel %vm1075, %v1072, %v1004
        %v1083 = vsel %vm1075, %v1073, %v1005
        %v1084 = vsel %vm1075, %v1074, %v1006
        %v1085 = vld [vmem:[%s3] sm:$0xff]
        %v1086 = vld [vmem:[%s3 + $0x8] sm:$0xff]
        %v1087 = vld [vmem:[%s3 + $0x10] sm:$0xff]
        %v1088 = vld [vmem:[%s3 + $0x18] sm:$0xff]
        %v1089 = vld [vmem:[%s3 + $0x20] sm:$0xff]
        %v1090 = vld [vmem:[%s3 + $0x28] sm:$0xff]
        %v1091 = vld [vmem:[%s3 + $0x30] sm:$0xff]
        %v1092 = vld [vmem:[%s3 + $0x38] sm:$0xff]
        %v1093 = vld [vmem:[%s3 + $0x40] sm:$0xff]
        %v1094 = vld [vmem:[%s3 + $0x48] sm:$0xff]
        %v1095 = vld [vmem:[%s3 + $0x50] sm:$0xff]
        %v1096 = vld [vmem:[%s3 + $0x58] sm:$0xff]
        %v1097 = vld [vmem:[%s3 + $0x60] sm:$0xff]
        %v1098 = vld [vmem:[%s3 + $0x68] sm:$0xff]
        %v1099 = vld [vmem:[%s3 + $0x70] sm:$0xff]
        %v1100 = vld [vmem:[%s3 + $0x78] sm:$0xff]
        %v1101 = vld [vmem:[%s3 + $0x80] sm:$0xff]
        %v1102 = vld [vmem:[%s3 + $0x88] sm:$0xff]
        %v1103 = vld [vmem:[%s3 + $0x90] sm:$0xff]
        %v1104 = vld [vmem:[%s3 + $0x98] sm:$0xff]
        %v1105 = vld [vmem:[%s3 + $0xa0] sm:$0xff]
        %v1106 = vld [vmem:[%s3 + $0xa8] sm:$0xff]
        %v1107 = vld [vmem:[%s3 + $0xb0] sm:$0xff]
        %v1108 = vld [vmem:[%s3 + $0xb8] sm:$0xff]
        %v1109 = vld [vmem:[%s3 + $0xc0] sm:$0xff]
        %v1110 = vld [vmem:[%s3 + $0xc8] sm:$0xff]
        %v1111 = vld [vmem:[%s3 + $0xd0] sm:$0xff]
        %v1112 = vld [vmem:[%s3 + $0xd8] sm:$0xff]
        %v1113 = vld [vmem:[%s3 + $0xe0] sm:$0xff]
        %v1114 = vld [vmem:[%s3 + $0xe8] sm:$0xff]
        %v1115 = vld [vmem:[%s3 + $0xf0] sm:$0xff]
        %v1116 = vld [vmem:[%s3 + $0xf8] sm:$0xff]
        %v1117 = vld [vmem:[%s3 + $0x100] sm:$0xff]
        %v1118 = vld [vmem:[%s3 + $0x108] sm:$0xff]
        %v1119 = vld [vmem:[%s3 + $0x110] sm:$0xff]
        %v1120 = vld [vmem:[%s3 + $0x118] sm:$0xff]
        %v1121 = vld [vmem:[%s3 + $0x120] sm:$0xff]
        %v1122 = vld [vmem:[%s3 + $0x128] sm:$0xff]
        %v1123 = vld [vmem:[%s3 + $0x130] sm:$0xff]
        %v1124 = vld [vmem:[%s3 + $0x138] sm:$0xff]
        %v1125 = vld [vmem:[%s3 + $0x140] sm:$0xff]
        %v1126 = vld [vmem:[%s3 + $0x148] sm:$0xff]
        %v1127 = vld [vmem:[%s3 + $0x150] sm:$0xff]
        %v1128 = vld [vmem:[%s3 + $0x158] sm:$0xff]
        %v1129 = vld [vmem:[%s3 + $0x160] sm:$0xff]
        %v1130 = vld [vmem:[%s3 + $0x168] sm:$0xff]
        %v1131 = vld [vmem:[%s3 + $0x170] sm:$0xff]
        %v1132 = vld [vmem:[%s3 + $0x178] sm:$0xff]
        %v1133 = vld [vmem:[%s3 + $0x180] sm:$0xff]
        %v1134 = vld [vmem:[%s3 + $0x188] sm:$0xff]
        %v1135 = vld [vmem:[%s3 + $0x190] sm:$0xff]
        %v1136 = vld [vmem:[%s3 + $0x198] sm:$0xff]
        %v1137 = vld [vmem:[%s3 + $0x1a0] sm:$0xff]
        %v1138 = vld [vmem:[%s3 + $0x1a8] sm:$0xff]
        %v1139 = vld [vmem:[%s3 + $0x1b0] sm:$0xff]
        %v1140 = vld [vmem:[%s3 + $0x1b8] sm:$0xff]
        %v1141 = vld [vmem:[%s3 + $0x1c0] sm:$0xff]
        %v1142 = vld [vmem:[%s3 + $0x1c8] sm:$0xff]
        %v1143 = vld [vmem:[%s3 + $0x1d0] sm:$0xff]
        %v1144 = vld [vmem:[%s3 + $0x1d8] sm:$0xff]
        %v1145 = vld [vmem:[%s3 + $0x1e0] sm:$0xff]
        %v1146 = vld [vmem:[%s3 + $0x1e8] sm:$0xff]
        %v1147 = vld [vmem:[%s3 + $0x1f0] sm:$0xff]
        %v1148 = vld [vmem:[%s3 + $0x1f8] sm:$0xff]
        %v1149 = vld [vmem:[%s3 + $0x200] sm:$0xff]
        %v1150 = vld [vmem:[%s3 + $0x208] sm:$0xff]
        %v1151 = vld [vmem:[%s3 + $0x210] sm:$0xff]
        %v1152 = vld [vmem:[%s3 + $0x218] sm:$0xff]
        %v1153 = vld [vmem:[%s3 + $0x220] sm:$0xff]
        %v1154 = vld [vmem:[%s3 + $0x228] sm:$0xff]
        %v1155 = vld [vmem:[%s3 + $0x230] sm:$0xff]
        %v1156 = vld [vmem:[%s3 + $0x238] sm:$0xff]
        %v1157 = vld [vmem:[%s3 + $0x240] sm:$0xff]
        %v1158 = vld [vmem:[%s3 + $0x248] sm:$0xff]
        %v1159 = vld [vmem:[%s3 + $0x250] sm:$0xff]
        %v1160 = vld [vmem:[%s3 + $0x258] sm:$0xff]
        %v1161 = vld [vmem:[%s3 + $0x260] sm:$0xff]
        %v1162 = vld [vmem:[%s3 + $0x268] sm:$0xff]
        %v1163 = vld [vmem:[%s3 + $0x270] sm:$0xff]
        %v1164 = vld [vmem:[%s3 + $0x278] sm:$0xff]
        %v1165 = vld [vmem:[%s3 + $0x280] sm:$0xff]
        %v1166 = vld [vmem:[%s3 + $0x288] sm:$0xff]
        %v1167 = vld [vmem:[%s3 + $0x290] sm:$0xff]
        %v1168 = vld [vmem:[%s3 + $0x298] sm:$0xff]
        %v1169 = vld [vmem:[%s3 + $0x2a0] sm:$0xff]
        %v1170 = vld [vmem:[%s3 + $0x2a8] sm:$0xff]
        %v1171 = vld [vmem:[%s3 + $0x2b0] sm:$0xff]
        %v1172 = vld [vmem:[%s3 + $0x2b8] sm:$0xff]
        %v1173 = vld [vmem:[%s3 + $0x2c0] sm:$0xff]
        %v1174 = vld [vmem:[%s3 + $0x2c8] sm:$0xff]
        %v1175 = vld [vmem:[%s3 + $0x2d0] sm:$0xff]
        %v1176 = vld [vmem:[%s3 + $0x2d8] sm:$0xff]
        %v1177 = vld [vmem:[%s3 + $0x2e0] sm:$0xff]
        %v1178 = vld [vmem:[%s3 + $0x2e8] sm:$0xff]
        %v1179 = vld [vmem:[%s3 + $0x2f0] sm:$0xff]
        %v1180 = vld [vmem:[%s3 + $0x2f8] sm:$0xff]
        %v1181 = vld [vmem:[%s3 + $0x300] sm:$0xff]
        %v1182 = vld [vmem:[%s3 + $0x308] sm:$0xff]
        %v1183 = vld [vmem:[%s3 + $0x310] sm:$0xff]
        %v1184 = vld [vmem:[%s3 + $0x318] sm:$0xff]
        %v1185 = vld [vmem:[%s3 + $0x320] sm:$0xff]
        %v1186 = vld [vmem:[%s3 + $0x328] sm:$0xff]
        %v1187 = vld [vmem:[%s3 + $0x330] sm:$0xff]
        %v1188 = vld [vmem:[%s3 + $0x338] sm:$0xff]
        %v1189 = vld [vmem:[%s3 + $0x340] sm:$0xff]
        %v1190 = vld [vmem:[%s3 + $0x348] sm:$0xff]
        %v1191 = vld [vmem:[%s3 + $0x350] sm:$0xff]
        %v1192 = vld [vmem:[%s3 + $0x358] sm:$0xff]
        %v1193 = vld [vmem:[%s3 + $0x360] sm:$0xff]
        %v1194 = vld [vmem:[%s3 + $0x368] sm:$0xff]
        %v1195 = vld [vmem:[%s3 + $0x370] sm:$0xff]
        %v1196 = vld [vmem:[%s3 + $0x378] sm:$0xff]
        %v1197 = vld [vmem:[%s3 + $0x380] sm:$0xff]
        %v1198 = vld [vmem:[%s3 + $0x388] sm:$0xff]
        %v1199 = vld [vmem:[%s3 + $0x390] sm:$0xff]
        %v1200 = vld [vmem:[%s3 + $0x398] sm:$0xff]
        %v1201 = vld [vmem:[%s3 + $0x3a0] sm:$0xff]
        %v1202 = vld [vmem:[%s3 + $0x3a8] sm:$0xff]
        %v1203 = vld [vmem:[%s3 + $0x3b0] sm:$0xff]
        %v1204 = vld [vmem:[%s3 + $0x3b8] sm:$0xff]
        %v1205 = vld [vmem:[%s3 + $0x3c0] sm:$0xff]
        %v1206 = vld [vmem:[%s3 + $0x3c8] sm:$0xff]
        %v1207 = vld [vmem:[%s3 + $0x3d0] sm:$0xff]
        %v1208 = vld [vmem:[%s3 + $0x3d8] sm:$0xff]
        %v1209 = vld [vmem:[%s3 + $0x3e0] sm:$0xff]
        %v1210 = vld [vmem:[%s3 + $0x3e8] sm:$0xff]
        %v1211 = vld [vmem:[%s3 + $0x3f0] sm:$0xff]
        %v1212 = vld [vmem:[%s3 + $0x3f8] sm:$0xff]
        %v1213 = vld [vmem:[%s3 + $0x400] sm:$0xff]
        %v1214 = vld [vmem:[%s3 + $0x408] sm:$0xff]
        %v1215 = vld [vmem:[%s3 + $0x410] sm:$0xff]
        %v1216 = vld [vmem:[%s3 + $0x418] sm:$0xff]
        %v1217 = vld [vmem:[%s3 + $0x420] sm:$0xff]
        %v1218 = vld [vmem:[%s3 + $0x428] sm:$0xff]
        %v1219 = vld [vmem:[%s3 + $0x430] sm:$0xff]
        %v1220 = vld [vmem:[%s3 + $0x438] sm:$0xff]
        %v1221 = vld [vmem:[%s3 + $0x440] sm:$0xff]
        %v1222 = vld [vmem:[%s3 + $0x448] sm:$0xff]
        %v1223 = vld [vmem:[%s3 + $0x450] sm:$0xff]
        %v1224 = vld [vmem:[%s3 + $0x458] sm:$0xff]
        %v1225 = vld [vmem:[%s3 + $0x460] sm:$0xff]
        %v1226 = vld [vmem:[%s3 + $0x468] sm:$0xff]
        %v1227 = vld [vmem:[%s3 + $0x470] sm:$0xff]
        %v1228 = vld [vmem:[%s3 + $0x478] sm:$0xff]
        %v1229 = vld [vmem:[%s3 + $0x480] sm:$0xff]
        %v1230 = vld [vmem:[%s3 + $0x488] sm:$0xff]
        %v1231 = vld [vmem:[%s3 + $0x490] sm:$0xff]
        %v1232 = vld [vmem:[%s3 + $0x498] sm:$0xff]
        %v1233 = vld [vmem:[%s3 + $0x4a0] sm:$0xff]
        %v1234 = vld [vmem:[%s3 + $0x4a8] sm:$0xff]
        %v1235 = vld [vmem:[%s3 + $0x4b0] sm:$0xff]
        %v1236 = vld [vmem:[%s3 + $0x4b8] sm:$0xff]
        %v1237 = vld [vmem:[%s3 + $0x4c0] sm:$0xff]
        %v1238 = vld [vmem:[%s3 + $0x4c8] sm:$0xff]
        %v1239 = vld [vmem:[%s3 + $0x4d0] sm:$0xff]
        %v1240 = vld [vmem:[%s3 + $0x4d8] sm:$0xff]
        %v1241 = vld [vmem:[%s3 + $0x4e0] sm:$0xff]
        %v1242 = vld [vmem:[%s3 + $0x4e8] sm:$0xff]
        %v1243 = vld [vmem:[%s3 + $0x4f0] sm:$0xff]
        %v1244 = vld [vmem:[%s3 + $0x4f8] sm:$0xff]
        %v1245 = vld [vmem:[%s3 + $0x500] sm:$0xff]
        %v1246 = vld [vmem:[%s3 + $0x508] sm:$0xff]
        %v1247 = vld [vmem:[%s3 + $0x510] sm:$0xff]
        %v1248 = vld [vmem:[%s3 + $0x518] sm:$0xff]
        %v1249 = vld [vmem:[%s3 + $0x520] sm:$0xff]
        %v1250 = vld [vmem:[%s3 + $0x528] sm:$0xff]
        %v1251 = vld [vmem:[%s3 + $0x530] sm:$0xff]
        %v1252 = vld [vmem:[%s3 + $0x538] sm:$0xff]
        %v1253 = vld [vmem:[%s3 + $0x540] sm:$0xff]
        %v1254 = vld [vmem:[%s3 + $0x548] sm:$0xff]
        %v1255 = vld [vmem:[%s3 + $0x550] sm:$0xff]
        %v1256 = vld [vmem:[%s3 + $0x558] sm:$0xff]
        %v1257 = vld [vmem:[%s3 + $0x560] sm:$0xff]
        %v1258 = vld [vmem:[%s3 + $0x568] sm:$0xff]
        %v1259 = vld [vmem:[%s3 + $0x570] sm:$0xff]
        %v1260 = vld [vmem:[%s3 + $0x578] sm:$0xff]
        %v1261 = vld [vmem:[%s3 + $0x580] sm:$0xff]
        %v1262 = vld [vmem:[%s3 + $0x588] sm:$0xff]
        %v1263 = vld [vmem:[%s3 + $0x590] sm:$0xff]
        %v1264 = vld [vmem:[%s3 + $0x598] sm:$0xff]
        %v1265 = vld [vmem:[%s3 + $0x5a0] sm:$0xff]
        %v1266 = vld [vmem:[%s3 + $0x5a8] sm:$0xff]
        %v1267 = vld [vmem:[%s3 + $0x5b0] sm:$0xff]
        %v1268 = vld [vmem:[%s3 + $0x5b8] sm:$0xff]
        %v1269 = vld [vmem:[%s3 + $0x5c0] sm:$0xff]
        %v1270 = vld [vmem:[%s3 + $0x5c8] sm:$0xff]
        %v1271 = vld [vmem:[%s3 + $0x5d0] sm:$0xff]
        %v1272 = vld [vmem:[%s3 + $0x5d8] sm:$0xff]
        %v1273 = vld [vmem:[%s3 + $0x5e0] sm:$0xff]
        %v1274 = vld [vmem:[%s3 + $0x5e8] sm:$0xff]
        %v1275 = vld [vmem:[%s3 + $0x5f0] sm:$0xff]
        %v1276 = vld [vmem:[%s3 + $0x5f8] sm:$0xff]
        %v1277 = vld [vmem:[%s3 + $0x600] sm:$0xff]
        %v1278 = vld [vmem:[%s3 + $0x608] sm:$0xff]
        %v1279 = vld [vmem:[%s3 + $0x610] sm:$0xff]
        %v1280 = vld [vmem:[%s3 + $0x618] sm:$0xff]
        %v1281 = vld [vmem:[%s3 + $0x620] sm:$0xff]
        %v1282 = vld [vmem:[%s3 + $0x628] sm:$0xff]
        %v1283 = vld [vmem:[%s3 + $0x630] sm:$0xff]
        %v1284 = vld [vmem:[%s3 + $0x638] sm:$0xff]
        %v1285 = vld [vmem:[%s3 + $0x640] sm:$0xff]
        %v1286 = vld [vmem:[%s3 + $0x648] sm:$0xff]
        %v1287 = vld [vmem:[%s3 + $0x650] sm:$0xff]
        %v1288 = vld [vmem:[%s3 + $0x658] sm:$0xff]
        %v1289 = vld [vmem:[%s3 + $0x660] sm:$0xff]
        %v1290 = vld [vmem:[%s3 + $0x668] sm:$0xff]
        %v1291 = vld [vmem:[%s3 + $0x670] sm:$0xff]
        %v1292 = vld [vmem:[%s3 + $0x678] sm:$0xff]
        %v1293 = vld [vmem:[%s3 + $0x680] sm:$0xff]
        %v1294 = vld [vmem:[%s3 + $0x688] sm:$0xff]
        %v1295 = vld [vmem:[%s3 + $0x690] sm:$0xff]
        %v1296 = vld [vmem:[%s3 + $0x698] sm:$0xff]
        %v1297 = vld [vmem:[%s3 + $0x6a0] sm:$0xff]
        %v1298 = vld [vmem:[%s3 + $0x6a8] sm:$0xff]
        %v1299 = vld [vmem:[%s3 + $0x6b0] sm:$0xff]
        %v1300 = vld [vmem:[%s3 + $0x6b8] sm:$0xff]
        %v1301 = vld [vmem:[%s3 + $0x6c0] sm:$0xff]
        %v1302 = vld [vmem:[%s3 + $0x6c8] sm:$0xff]
        %v1303 = vld [vmem:[%s3 + $0x6d0] sm:$0xff]
        %v1304 = vld [vmem:[%s3 + $0x6d8] sm:$0xff]
        %v1305 = vld [vmem:[%s3 + $0x6e0] sm:$0xff]
        %v1306 = vld [vmem:[%s3 + $0x6e8] sm:$0xff]
        %v1307 = vld [vmem:[%s3 + $0x6f0] sm:$0xff]
        %v1308 = vld [vmem:[%s3 + $0x6f8] sm:$0xff]
        %v1309 = vld [vmem:[%s3 + $0x700] sm:$0xff]
        %v1310 = vld [vmem:[%s3 + $0x708] sm:$0xff]
        %v1311 = vld [vmem:[%s3 + $0x710] sm:$0xff]
        %v1312 = vld [vmem:[%s3 + $0x718] sm:$0xff]
        %v1313 = vld [vmem:[%s3 + $0x720] sm:$0xff]
        %v1314 = vld [vmem:[%s3 + $0x728] sm:$0xff]
        %v1315 = vld [vmem:[%s3 + $0x730] sm:$0xff]
        %v1316 = vld [vmem:[%s3 + $0x738] sm:$0xff]
        %v1317 = vld [vmem:[%s3 + $0x740] sm:$0xff]
        %v1318 = vld [vmem:[%s3 + $0x748] sm:$0xff]
        %v1319 = vld [vmem:[%s3 + $0x750] sm:$0xff]
        %v1320 = vld [vmem:[%s3 + $0x758] sm:$0xff]
        %v1321 = vld [vmem:[%s3 + $0x760] sm:$0xff]
        %v1322 = vld [vmem:[%s3 + $0x768] sm:$0xff]
        %v1323 = vld [vmem:[%s3 + $0x770] sm:$0xff]
        %v1324 = vld [vmem:[%s3 + $0x778] sm:$0xff]
        %v1325 = vld [vmem:[%s3 + $0x780] sm:$0xff]
        %v1326 = vld [vmem:[%s3 + $0x788] sm:$0xff]
        %v1327 = vld [vmem:[%s3 + $0x790] sm:$0xff]
        %v1328 = vld [vmem:[%s3 + $0x798] sm:$0xff]
        %v1329 = vld [vmem:[%s3 + $0x7a0] sm:$0xff]
        %v1330 = vld [vmem:[%s3 + $0x7a8] sm:$0xff]
        %v1331 = vld [vmem:[%s3 + $0x7b0] sm:$0xff]
        %v1332 = vld [vmem:[%s3 + $0x7b8] sm:$0xff]
        %v1333 = vld [vmem:[%s3 + $0x7c0] sm:$0xff]
        %v1334 = vld [vmem:[%s3 + $0x7c8] sm:$0xff]
        %v1335 = vld [vmem:[%s3 + $0x7d0] sm:$0xff]
        %v1336 = vld [vmem:[%s3 + $0x7d8] sm:$0xff]
        %v1337 = vld [vmem:[%s3 + $0x7e0] sm:$0xff]
        %v1338 = vld [vmem:[%s3 + $0x7e8] sm:$0xff]
        %v1339 = vld [vmem:[%s3 + $0x7f0] sm:$0xff]
        %v1340 = vld [vmem:[%s3 + $0x7f8] sm:$0xff]
        %v1341 = vld [vmem:[%s3 + $0x800] sm:$0xff]
        %v1342 = vld [vmem:[%s3 + $0x808] sm:$0xff]
        %v1343 = vld [vmem:[%s3 + $0x810] sm:$0xff]
        %v1344 = vld [vmem:[%s3 + $0x818] sm:$0xff]
        %v1345 = vld [vmem:[%s3 + $0x820] sm:$0xff]
        %v1346 = vld [vmem:[%s3 + $0x828] sm:$0xff]
        %v1347 = vld [vmem:[%s3 + $0x830] sm:$0xff]
        %v1348 = vld [vmem:[%s3 + $0x838] sm:$0xff]
        %v1349 = vld [vmem:[%s3 + $0x840] sm:$0xff]
        %v1350 = vld [vmem:[%s3 + $0x848] sm:$0xff]
        %v1351 = vld [vmem:[%s3 + $0x850] sm:$0xff]
        %v1352 = vld [vmem:[%s3 + $0x858] sm:$0xff]
        %v1353 = vld [vmem:[%s3 + $0x860] sm:$0xff]
        %v1354 = vld [vmem:[%s3 + $0x868] sm:$0xff]
        %v1355 = vld [vmem:[%s3 + $0x870] sm:$0xff]
        %v1356 = vld [vmem:[%s3 + $0x878] sm:$0xff]
        %v1357 = vld [vmem:[%s3 + $0x880] sm:$0xff]
        %v1358 = vld [vmem:[%s3 + $0x888] sm:$0xff]
        %v1359 = vld [vmem:[%s3 + $0x890] sm:$0xff]
        %v1360 = vld [vmem:[%s3 + $0x898] sm:$0xff]
        %v1361 = vld [vmem:[%s3 + $0x8a0] sm:$0xff]
        %v1362 = vld [vmem:[%s3 + $0x8a8] sm:$0xff]
        %v1363 = vld [vmem:[%s3 + $0x8b0] sm:$0xff]
        %v1364 = vld [vmem:[%s3 + $0x8b8] sm:$0xff]
        %v1365 = vld [vmem:[%s3 + $0x8c0] sm:$0xff]
        %v1366 = vld [vmem:[%s3 + $0x8c8] sm:$0xff]
        %v1367 = vld [vmem:[%s3 + $0x8d0] sm:$0xff]
        %v1368 = vld [vmem:[%s3 + $0x8d8] sm:$0xff]
        %v1369 = vld [vmem:[%s3 + $0x8e0] sm:$0xff]
        %v1370 = vld [vmem:[%s3 + $0x8e8] sm:$0xff]
        %v1371 = vld [vmem:[%s3 + $0x8f0] sm:$0xff]
        %v1372 = vld [vmem:[%s3 + $0x8f8] sm:$0xff]
        %v1373 = vld [vmem:[%s4] sm:$0x3]
        %v1375 = vlaneseq
        %v1376 = vshrl.u32 %v1375, 7
        %v1377 = vsub.s32 0, %v1376
        %v1378 = vrot.slane %v1373, %v1377
        %v1379 = vlaneseq
        %v1380 = vshrl.u32 %v1379, 7
        %v1381 = vsub.s32 1, %v1380
        %v1382 = vrot.slane %v1373, %v1381
        %1385 = vmatprep.subr.mxu0 %v1116
        %1386 = vmatpush1.msra.mxu0 %v1115
        %1387 = vmatprep.subr.mxu0 %v1114
        %1388 = vmatpush1.msra.mxu0 %v1113
        %1389 = vmatprep.subr.mxu0 %v1112
        %1390 = vmatpush1.msra.mxu0 %v1111
        %1391 = vmatprep.subr.mxu0 %v1110
        %1392 = vmatpush1.msra.mxu0 %v1109
        %1393 = vmatprep.subr.mxu0 %v1108
        %1394 = vmatpush1.msra.mxu0 %v1107
        %1395 = vmatprep.subr.mxu0 %v1106
        %1396 = vmatpush1.msra.mxu0 %v1105
        %1397 = vmatprep.subr.mxu0 %v1104
        %1398 = vmatpush1.msra.mxu0 %v1103
        %1399 = vmatprep.subr.mxu0 %v1102
        %1400 = vmatpush1.msra.mxu0 %v1101
        %1401 = vmatprep.subr.mxu0 %v1100
        %1402 = vmatpush1.msra.mxu0 %v1099
        %1403 = vmatprep.subr.mxu0 %v1098
        %1404 = vmatpush1.msra.mxu0 %v1097
        %1405 = vmatprep.subr.mxu0 %v1096
        %1406 = vmatpush1.msra.mxu0 %v1095
        %1407 = vmatprep.subr.mxu0 %v1094
        %1408 = vmatpush1.msra.mxu0 %v1093
        %1409 = vmatprep.subr.mxu0 %v1092
        %1410 = vmatpush1.msra.mxu0 %v1091
        %1411 = vmatprep.subr.mxu0 %v1090
        %1412 = vmatpush1.msra.mxu0 %v1089
        %1413 = vmatprep.subr.mxu0 %v1088
        %1414 = vmatpush1.msra.mxu0 %v1087
        %1415 = vmatprep.subr.mxu0 %v1086
        %1416 = vmatpush1.msra.mxu0 %v1085
        %1417 = vmatprep.subr.mxu0 %v1148
        %1418 = vmatpush2.msra.mxu0 %v1147
        %1419 = vmatprep.subr.mxu0 %v1146
        %1420 = vmatpush2.msra.mxu0 %v1145
        %1421 = vmatprep.subr.mxu0 %v1144
        %1422 = vmatpush2.msra.mxu0 %v1143
        %1423 = vmatprep.subr.mxu0 %v1142
        %1424 = vmatpush2.msra.mxu0 %v1141
        %1425 = vmatprep.subr.mxu0 %v1140
        %1426 = vmatpush2.msra.mxu0 %v1139
        %1427 = vmatprep.subr.mxu0 %v1138
        %1428 = vmatpush2.msra.mxu0 %v1137
        %1429 = vmatprep.subr.mxu0 %v1136
        %1430 = vmatpush2.msra.mxu0 %v1135
        %1431 = vmatprep.subr.mxu0 %v1134
        %1432 = vmatpush2.msra.mxu0 %v1133
        %1433 = vmatprep.subr.mxu0 %v1132
        %1434 = vmatpush2.msra.mxu0 %v1131
        %1435 = vmatprep.subr.mxu0 %v1130
        %1436 = vmatpush2.msra.mxu0 %v1129
        %1437 = vmatprep.subr.mxu0 %v1128
        %1438 = vmatpush2.msra.mxu0 %v1127
        %1439 = vmatprep.subr.mxu0 %v1126
        %1440 = vmatpush2.msra.mxu0 %v1125
        %1441 = vmatprep.subr.mxu0 %v1124
        %1442 = vmatpush2.msra.mxu0 %v1123
        %1443 = vmatprep.subr.mxu0 %v1122
        %1444 = vmatpush2.msra.mxu0 %v1121
        %1445 = vmatprep.subr.mxu0 %v1120
        %1446 = vmatpush2.msra.mxu0 %v1119
        %1447 = vmatprep.subr.mxu0 %v1118
        %1448 = vmatpush2.msra.mxu0 %v1117
        %1449 = vmatprep.mubr.f32.mxu0 %v1077
        %1450 = vmatmul.mubr.f32.gmra.mxu0 %v1076
        %v1451 = vpop.f32.mrf.mxu0
        %v1452 = vadd.f32 %v1378, %v1451
        %v1453 = vpop.f32.mrf.mxu0
        %v1454 = vadd.f32 %v1382, %v1453
        %1455 = vmatprep.mubr.f32.mxu0 %v886
        %1456 = vmatmul.mubr.f32.gmra.mxu0 %v780
        %v1457 = vpop.f32.mrf.mxu0
        %v1458 = vpop.f32.mrf.mxu0
        %1459 = vdwg.mxu0
        %1460 = vmatprep.subr.mxu0 %v1180
        %1461 = vmatpush1.msra.mxu0 %v1179
        %1462 = vmatprep.subr.mxu0 %v1178
        %1463 = vmatpush1.msra.mxu0 %v1177
        %1464 = vmatprep.subr.mxu0 %v1176
        %1465 = vmatpush1.msra.mxu0 %v1175
        %1466 = vmatprep.subr.mxu0 %v1174
        %1467 = vmatpush1.msra.mxu0 %v1173
        %1468 = vmatprep.subr.mxu0 %v1172
        %1469 = vmatpush1.msra.mxu0 %v1171
        %1470 = vmatprep.subr.mxu0 %v1170
        %1471 = vmatpush1.msra.mxu0 %v1169
        %1472 = vmatprep.subr.mxu0 %v1168
        %1473 = vmatpush1.msra.mxu0 %v1167
        %1474 = vmatprep.subr.mxu0 %v1166
        %1475 = vmatpush1.msra.mxu0 %v1165
        %1476 = vmatprep.subr.mxu0 %v1164
        %1477 = vmatpush1.msra.mxu0 %v1163
        %1478 = vmatprep.subr.mxu0 %v1162
        %1479 = vmatpush1.msra.mxu0 %v1161
        %1480 = vmatprep.subr.mxu0 %v1160
        %1481 = vmatpush1.msra.mxu0 %v1159
        %1482 = vmatprep.subr.mxu0 %v1158
        %1483 = vmatpush1.msra.mxu0 %v1157
        %1484 = vmatprep.subr.mxu0 %v1156
        %1485 = vmatpush1.msra.mxu0 %v1155
        %1486 = vmatprep.subr.mxu0 %v1154
        %1487 = vmatpush1.msra.mxu0 %v1153
        %1488 = vmatprep.subr.mxu0 %v1152
        %1489 = vmatpush1.msra.mxu0 %v1151
        %1490 = vmatprep.subr.mxu0 %v1150
        %1491 = vmatpush1.msra.mxu0 %v1149
        %1492 = vmatprep.subr.mxu0 %v1212
        %1493 = vmatpush2.msra.mxu0 %v1211
        %1494 = vmatprep.subr.mxu0 %v1210
        %1495 = vmatpush2.msra.mxu0 %v1209
        %1496 = vmatprep.subr.mxu0 %v1208
        %1497 = vmatpush2.msra.mxu0 %v1207
        %1498 = vmatprep.subr.mxu0 %v1206
        %1499 = vmatpush2.msra.mxu0 %v1205
        %1500 = vmatprep.subr.mxu0 %v1204
        %1501 = vmatpush2.msra.mxu0 %v1203
        %1502 = vmatprep.subr.mxu0 %v1202
        %1503 = vmatpush2.msra.mxu0 %v1201
        %1504 = vmatprep.subr.mxu0 %v1200
        %1505 = vmatpush2.msra.mxu0 %v1199
        %1506 = vmatprep.subr.mxu0 %v1198
        %1507 = vmatpush2.msra.mxu0 %v1197
        %1508 = vmatprep.subr.mxu0 %v1196
        %1509 = vmatpush2.msra.mxu0 %v1195
        %1510 = vmatprep.subr.mxu0 %v1194
        %1511 = vmatpush2.msra.mxu0 %v1193
        %1512 = vmatprep.subr.mxu0 %v1192
        %1513 = vmatpush2.msra.mxu0 %v1191
        %1514 = vmatprep.subr.mxu0 %v1190
        %1515 = vmatpush2.msra.mxu0 %v1189
        %1516 = vmatprep.subr.mxu0 %v1188
        %1517 = vmatpush2.msra.mxu0 %v1187
        %1518 = vmatprep.subr.mxu0 %v1186
        %1519 = vmatpush2.msra.mxu0 %v1185
        %1520 = vmatprep.subr.mxu0 %v1184
        %1521 = vmatpush2.msra.mxu0 %v1183
        %1522 = vmatprep.subr.mxu0 %v1182
        %1523 = vmatpush2.msra.mxu0 %v1181
        %1524 = vmatprep.mubr.f32.mxu0 %v1079
        %1525 = vmatmul.mubr.f32.gmra.mxu0 %v1078
        %v1526 = vpop.f32.mrf.mxu0
        %v1527 = vadd.f32 %v1452, %v1526
        %v1528 = vpop.f32.mrf.mxu0
        %v1529 = vadd.f32 %v1454, %v1528
        %1530 = vmatprep.mubr.f32.mxu0 %v882
        %1531 = vmatmul.mubr.f32.gmra.mxu0 %v872
        %v1532 = vpop.f32.mrf.mxu0
        %v1533 = vpop.f32.mrf.mxu0
        %1534 = vdwg.mxu0
        %1535 = vmatprep.subr.mxu0 %v1244
        %1536 = vmatpush1.msra.mxu0 %v1243
        %1537 = vmatprep.subr.mxu0 %v1242
        %1538 = vmatpush1.msra.mxu0 %v1241
        %1539 = vmatprep.subr.mxu0 %v1240
        %1540 = vmatpush1.msra.mxu0 %v1239
        %1541 = vmatprep.subr.mxu0 %v1238
        %1542 = vmatpush1.msra.mxu0 %v1237
        %1543 = vmatprep.subr.mxu0 %v1236
        %1544 = vmatpush1.msra.mxu0 %v1235
        %1545 = vmatprep.subr.mxu0 %v1234
        %1546 = vmatpush1.msra.mxu0 %v1233
        %1547 = vmatprep.subr.mxu0 %v1232
        %1548 = vmatpush1.msra.mxu0 %v1231
        %1549 = vmatprep.subr.mxu0 %v1230
        %1550 = vmatpush1.msra.mxu0 %v1229
        %1551 = vmatprep.subr.mxu0 %v1228
        %1552 = vmatpush1.msra.mxu0 %v1227
        %1553 = vmatprep.subr.mxu0 %v1226
        %1554 = vmatpush1.msra.mxu0 %v1225
        %1555 = vmatprep.subr.mxu0 %v1224
        %1556 = vmatpush1.msra.mxu0 %v1223
        %1557 = vmatprep.subr.mxu0 %v1222
        %1558 = vmatpush1.msra.mxu0 %v1221
        %1559 = vmatprep.subr.mxu0 %v1220
        %1560 = vmatpush1.msra.mxu0 %v1219
        %1561 = vmatprep.subr.mxu0 %v1218
        %1562 = vmatpush1.msra.mxu0 %v1217
        %1563 = vmatprep.subr.mxu0 %v1216
        %1564 = vmatpush1.msra.mxu0 %v1215
        %1565 = vmatprep.subr.mxu0 %v1214
        %1566 = vmatpush1.msra.mxu0 %v1213
        %1567 = vmatprep.subr.mxu0 %v1276
        %1568 = vmatpush2.msra.mxu0 %v1275
        %1569 = vmatprep.subr.mxu0 %v1274
        %1570 = vmatpush2.msra.mxu0 %v1273
        %1571 = vmatprep.subr.mxu0 %v1272
        %1572 = vmatpush2.msra.mxu0 %v1271
        %1573 = vmatprep.subr.mxu0 %v1270
        %1574 = vmatpush2.msra.mxu0 %v1269
        %1575 = vmatprep.subr.mxu0 %v1268
        %1576 = vmatpush2.msra.mxu0 %v1267
        %1577 = vmatprep.subr.mxu0 %v1266
        %1578 = vmatpush2.msra.mxu0 %v1265
        %1579 = vmatprep.subr.mxu0 %v1264
        %1580 = vmatpush2.msra.mxu0 %v1263
        %1581 = vmatprep.subr.mxu0 %v1262
        %1582 = vmatpush2.msra.mxu0 %v1261
        %1583 = vmatprep.subr.mxu0 %v1260
        %1584 = vmatpush2.msra.mxu0 %v1259
        %1585 = vmatprep.subr.mxu0 %v1258
        %1586 = vmatpush2.msra.mxu0 %v1257
        %1587 = vmatprep.subr.mxu0 %v1256
        %1588 = vmatpush2.msra.mxu0 %v1255
        %1589 = vmatprep.subr.mxu0 %v1254
        %1590 = vmatpush2.msra.mxu0 %v1253
        %1591 = vmatprep.subr.mxu0 %v1252
        %1592 = vmatpush2.msra.mxu0 %v1251
        %1593 = vmatprep.subr.mxu0 %v1250
        %1594 = vmatpush2.msra.mxu0 %v1249
        %1595 = vmatprep.subr.mxu0 %v1248
        %1596 = vmatpush2.msra.mxu0 %v1247
        %1597 = vmatprep.subr.mxu0 %v1246
        %1598 = vmatpush2.msra.mxu0 %v1245
        %1599 = vmatprep.mubr.f32.mxu0 %v1081
        %1600 = vmatmul.mubr.f32.gmra.mxu0 %v1080
        %v1601 = vpop.f32.mrf.mxu0
        %v1602 = vadd.f32 %v1527, %v1601
        %v1603 = vpop.f32.mrf.mxu0
        %v1604 = vadd.f32 %v1529, %v1603
        %1605 = vmatprep.mubr.f32.mxu0 %v891
        %1606 = vmatmul.mubr.f32.gmra.mxu0 %v806
        %v1607 = vpop.f32.mrf.mxu0
        %v1608 = vpop.f32.mrf.mxu0
        %1609 = vdwg.mxu0
        %1610 = vmatprep.subr.mxu0 %v1308
        %1611 = vmatpush1.msra.mxu0 %v1307
        %1612 = vmatprep.subr.mxu0 %v1306
        %1613 = vmatpush1.msra.mxu0 %v1305
        %1614 = vmatprep.subr.mxu0 %v1304
        %1615 = vmatpush1.msra.mxu0 %v1303
        %1616 = vmatprep.subr.mxu0 %v1302
        %1617 = vmatpush1.msra.mxu0 %v1301
        %1618 = vmatprep.subr.mxu0 %v1300
        %1619 = vmatpush1.msra.mxu0 %v1299
        %1620 = vmatprep.subr.mxu0 %v1298
        %1621 = vmatpush1.msra.mxu0 %v1297
        %1622 = vmatprep.subr.mxu0 %v1296
        %1623 = vmatpush1.msra.mxu0 %v1295
        %1624 = vmatprep.subr.mxu0 %v1294
        %1625 = vmatpush1.msra.mxu0 %v1293
        %1626 = vmatprep.subr.mxu0 %v1292
        %1627 = vmatpush1.msra.mxu0 %v1291
        %1628 = vmatprep.subr.mxu0 %v1290
        %1629 = vmatpush1.msra.mxu0 %v1289
        %1630 = vmatprep.subr.mxu0 %v1288
        %1631 = vmatpush1.msra.mxu0 %v1287
        %1632 = vmatprep.subr.mxu0 %v1286
        %1633 = vmatpush1.msra.mxu0 %v1285
        %1634 = vmatprep.subr.mxu0 %v1284
        %1635 = vmatpush1.msra.mxu0 %v1283
        %1636 = vmatprep.subr.mxu0 %v1282
        %1637 = vmatpush1.msra.mxu0 %v1281
        %1638 = vmatprep.subr.mxu0 %v1280
        %1639 = vmatpush1.msra.mxu0 %v1279
        %1640 = vmatprep.subr.mxu0 %v1278
        %1641 = vmatpush1.msra.mxu0 %v1277
        %1642 = vmatprep.subr.mxu0 %v1340
        %1643 = vmatpush2.msra.mxu0 %v1339
        %1644 = vmatprep.subr.mxu0 %v1338
        %1645 = vmatpush2.msra.mxu0 %v1337
        %1646 = vmatprep.subr.mxu0 %v1336
        %1647 = vmatpush2.msra.mxu0 %v1335
        %1648 = vmatprep.subr.mxu0 %v1334
        %1649 = vmatpush2.msra.mxu0 %v1333
        %1650 = vmatprep.subr.mxu0 %v1332
        %1651 = vmatpush2.msra.mxu0 %v1331
        %1652 = vmatprep.subr.mxu0 %v1330
        %1653 = vmatpush2.msra.mxu0 %v1329
        %1654 = vmatprep.subr.mxu0 %v1328
        %1655 = vmatpush2.msra.mxu0 %v1327
        %1656 = vmatprep.subr.mxu0 %v1326
        %1657 = vmatpush2.msra.mxu0 %v1325
        %1658 = vmatprep.subr.mxu0 %v1324
        %1659 = vmatpush2.msra.mxu0 %v1323
        %1660 = vmatprep.subr.mxu0 %v1322
        %1661 = vmatpush2.msra.mxu0 %v1321
        %1662 = vmatprep.subr.mxu0 %v1320
        %1663 = vmatpush2.msra.mxu0 %v1319
        %1664 = vmatprep.subr.mxu0 %v1318
        %1665 = vmatpush2.msra.mxu0 %v1317
        %1666 = vmatprep.subr.mxu0 %v1316
        %1667 = vmatpush2.msra.mxu0 %v1315
        %1668 = vmatprep.subr.mxu0 %v1314
        %1669 = vmatpush2.msra.mxu0 %v1313
        %1670 = vmatprep.subr.mxu0 %v1312
        %1671 = vmatpush2.msra.mxu0 %v1311
        %1672 = vmatprep.subr.mxu0 %v1310
        %1673 = vmatpush2.msra.mxu0 %v1309
        %1674 = vmatprep.mubr.f32.mxu0 %v1083
        %1675 = vmatmul.mubr.f32.gmra.mxu0 %v1082
        %v1676 = vpop.f32.mrf.mxu0
        %v1677 = vadd.f32 %v1602, %v1676
        %v1678 = vpop.f32.mrf.mxu0
        %v1679 = vadd.f32 %v1604, %v1678
        %1680 = vmatprep.mubr.f32.mxu0 %v885
        %1681 = vmatmul.mubr.f32.gmra.mxu0 %v884
        %v1682 = vpop.f32.mrf.mxu0
        %v1683 = vpop.f32.mrf.mxu0
        %1684 = vdwg.mxu0
        %1685 = vmatprep.subr.mxu0 %v1372
        %1686 = vmatpush1.msra.mxu0 %v1371
        %1687 = vmatprep.subr.mxu0 %v1370
        %1688 = vmatpush1.msra.mxu0 %v1369
        %1689 = vmatprep.subr.mxu0 %v1368
        %1690 = vmatpush1.msra.mxu0 %v1367
        %1691 = vmatprep.subr.mxu0 %v1366
        %1692 = vmatpush1.msra.mxu0 %v1365
        %1693 = vmatprep.subr.mxu0 %v1364
        %1694 = vmatpush1.msra.mxu0 %v1363
        %1695 = vmatprep.subr.mxu0 %v1362
        %1696 = vmatpush1.msra.mxu0 %v1361
        %1697 = vmatprep.subr.mxu0 %v1360
        %1698 = vmatpush1.msra.mxu0 %v1359
        %1699 = vmatprep.subr.mxu0 %v1358
        %1700 = vmatpush1.msra.mxu0 %v1357
        %1701 = vmatprep.subr.mxu0 %v1356
        %1702 = vmatpush1.msra.mxu0 %v1355
        %1703 = vmatprep.subr.mxu0 %v1354
        %1704 = vmatpush1.msra.mxu0 %v1353
        %1705 = vmatprep.subr.mxu0 %v1352
        %1706 = vmatpush1.msra.mxu0 %v1351
        %1707 = vmatprep.subr.mxu0 %v1350
        %1708 = vmatpush1.msra.mxu0 %v1349
        %1709 = vmatprep.subr.mxu0 %v1348
        %1710 = vmatpush1.msra.mxu0 %v1347
        %1711 = vmatprep.subr.mxu0 %v1346
        %1712 = vmatpush1.msra.mxu0 %v1345
        %1713 = vmatprep.subr.mxu0 %v1344
        %1714 = vmatpush1.msra.mxu0 %v1343
        %1715 = vmatprep.subr.mxu0 %v1342
        %1716 = vmatpush1.msra.mxu0 %v1341
        %1717 = vmatprep.subr.mxu0 0.0
        %1718 = vmatpush2.msra.mxu0 0.0
        %1719 = vmatprep.subr.mxu0 0.0
        %1720 = vmatpush2.msra.mxu0 0.0
        %1721 = vmatprep.subr.mxu0 0.0
        %1722 = vmatpush2.msra.mxu0 0.0
        %1723 = vmatprep.subr.mxu0 0.0
        %1724 = vmatpush2.msra.mxu0 0.0
        %1725 = vmatprep.subr.mxu0 0.0
        %1726 = vmatpush2.msra.mxu0 0.0
        %1727 = vmatprep.subr.mxu0 0.0
        %1728 = vmatpush2.msra.mxu0 0.0
        %1729 = vmatprep.subr.mxu0 0.0
        %1730 = vmatpush2.msra.mxu0 0.0
        %1731 = vmatprep.subr.mxu0 0.0
        %1732 = vmatpush2.msra.mxu0 0.0
        %1733 = vmatprep.subr.mxu0 0.0
        %1734 = vmatpush2.msra.mxu0 0.0
        %1735 = vmatprep.subr.mxu0 0.0
        %1736 = vmatpush2.msra.mxu0 0.0
        %1737 = vmatprep.subr.mxu0 0.0
        %1738 = vmatpush2.msra.mxu0 0.0
        %1739 = vmatprep.subr.mxu0 0.0
        %1740 = vmatpush2.msra.mxu0 0.0
        %1741 = vmatprep.subr.mxu0 0.0
        %1742 = vmatpush2.msra.mxu0 0.0
        %1743 = vmatprep.subr.mxu0 0.0
        %1744 = vmatpush2.msra.mxu0 0.0
        %1745 = vmatprep.subr.mxu0 0.0
        %1746 = vmatpush2.msra.mxu0 0.0
        %1747 = vmatprep.subr.mxu0 0.0
        %1748 = vmatpush2.msra.mxu0 0.0
        %1749 = vmatprep.mubr.f32.mxu0 0.0
        %1750 = vmatmul.mubr.f32.gmra.mxu0 %v1084
        %v1751 = vpop.f32.mrf.mxu0
        %v1752 = vadd.f32 %v1677, %v1751
        %v1753 = vpop.f32.mrf.mxu0
        %v1754 = vadd.f32 %v1679, %v1753
        %1755 = vmatprep.mubr.f32.mxu0 0.0
        %1756 = vmatmul.mubr.f32.gmra.mxu0 %v832
        %v1757 = vpop.f32.mrf.mxu0
        %v1758 = vpop.f32.mrf.mxu0
        %1759 = vdwg.mxu0
        %vm1760 = vcmp.gt.f32.partialorder %v1752, 0.0
        %vm1761 = vcmp.gt.f32.partialorder %v1754, 0.0
        %v1762 = vmul.f32 %v1752, 0.01
        %v1763 = vmul.f32 %v1754, 0.01
        %v1764 = vsel %vm1760, %v1752, %v1762
        %v1765 = vsel %vm1761, %v1754, %v1763
        %v1768 = vrot.slane %v1764, 1
        %v1769 = vrot.slane %v1765, 1
        %v1772 = vmax.f32 %v1764, %v1768
        %v1773 = vmax.f32 %v1765, %v1769
        %v1776 = vrot.slane %v1772, 3
        %v1777 = vrot.slane %v1773, 3
        %v1780 = vmax.f32 %v1772, %v1776
        %v1781 = vmax.f32 %v1773, %v1777
        %v1782 = vld [vmem:[%s5] sm:$0xff]
        %v1783 = vld [vmem:[%s5 + $0x8] sm:$0xff]
        %v1784 = vld [vmem:[%s5 + $0x10] sm:$0xff]
        %v1785 = vld [vmem:[%s5 + $0x18] sm:$0xff]
        %v1786 = vld [vmem:[%s5 + $0x20] sm:$0xff]
        %v1787 = vld [vmem:[%s5 + $0x28] sm:$0xff]
        %v1788 = vld [vmem:[%s5 + $0x30] sm:$0xff]
        %v1789 = vld [vmem:[%s5 + $0x38] sm:$0xff]
        %v1790 = vld [vmem:[%s5 + $0x40] sm:$0xff]
        %v1791 = vld [vmem:[%s5 + $0x48] sm:$0xff]
        %v1792 = vld [vmem:[%s5 + $0x50] sm:$0xff]
        %v1793 = vld [vmem:[%s5 + $0x58] sm:$0xff]
        %v1794 = vld [vmem:[%s5 + $0x60] sm:$0xff]
        %v1795 = vld [vmem:[%s5 + $0x68] sm:$0xff]
        %v1796 = vld [vmem:[%s5 + $0x70] sm:$0xff]
        %v1797 = vld [vmem:[%s5 + $0x78] sm:$0xff]
        %v1798 = vld [vmem:[%s5 + $0x80] sm:$0xff]
        %v1799 = vld [vmem:[%s5 + $0x88] sm:$0xff]
        %v1800 = vld [vmem:[%s5 + $0x90] sm:$0xff]
        %v1801 = vld [vmem:[%s5 + $0x98] sm:$0xff]
        %v1802 = vld [vmem:[%s5 + $0xa0] sm:$0xff]
        %v1803 = vld [vmem:[%s5 + $0xa8] sm:$0xff]
        %v1804 = vld [vmem:[%s5 + $0xb0] sm:$0xff]
        %v1805 = vld [vmem:[%s5 + $0xb8] sm:$0xff]
        %v1806 = vld [vmem:[%s5 + $0xc0] sm:$0xff]
        %v1807 = vld [vmem:[%s5 + $0xc8] sm:$0xff]
        %v1808 = vld [vmem:[%s5 + $0xd0] sm:$0xff]
        %v1809 = vld [vmem:[%s5 + $0xd8] sm:$0xff]
        %v1810 = vld [vmem:[%s5 + $0xe0] sm:$0xff]
        %v1811 = vld [vmem:[%s5 + $0xe8] sm:$0xff]
        %v1812 = vld [vmem:[%s5 + $0xf0] sm:$0xff]
        %v1813 = vld [vmem:[%s5 + $0xf8] sm:$0xff]
        %v1814 = vld [vmem:[%s6] sm:$0x1]
        %1815 = vmatprep.subr.mxu0 0.0
        %1816 = vmatpush1.msra.mxu0 %v1797
        %1817 = vmatprep.subr.mxu0 0.0
        %1818 = vmatpush1.msra.mxu0 %v1796
        %1819 = vmatprep.subr.mxu0 0.0
        %1820 = vmatpush1.msra.mxu0 %v1795
        %1821 = vmatprep.subr.mxu0 0.0
        %1822 = vmatpush1.msra.mxu0 %v1794
        %1823 = vmatprep.subr.mxu0 0.0
        %1824 = vmatpush1.msra.mxu0 %v1793
        %1825 = vmatprep.subr.mxu0 0.0
        %1826 = vmatpush1.msra.mxu0 %v1792
        %1827 = vmatprep.subr.mxu0 0.0
        %1828 = vmatpush1.msra.mxu0 %v1791
        %1829 = vmatprep.subr.mxu0 0.0
        %1830 = vmatpush1.msra.mxu0 %v1790
        %1831 = vmatprep.subr.mxu0 0.0
        %1832 = vmatpush1.msra.mxu0 %v1789
        %1833 = vmatprep.subr.mxu0 0.0
        %1834 = vmatpush1.msra.mxu0 %v1788
        %1835 = vmatprep.subr.mxu0 0.0
        %1836 = vmatpush1.msra.mxu0 %v1787
        %1837 = vmatprep.subr.mxu0 0.0
        %1838 = vmatpush1.msra.mxu0 %v1786
        %1839 = vmatprep.subr.mxu0 0.0
        %1840 = vmatpush1.msra.mxu0 %v1785
        %1841 = vmatprep.subr.mxu0 0.0
        %1842 = vmatpush1.msra.mxu0 %v1784
        %1843 = vmatprep.subr.mxu0 0.0
        %1844 = vmatpush1.msra.mxu0 %v1783
        %1845 = vmatprep.subr.mxu0 0.0
        %1846 = vmatpush1.msra.mxu0 %v1782
        %1847 = vmatprep.subr.mxu0 0.0
        %1848 = vmatpush2.msra.mxu0 %v1813
        %1849 = vmatprep.subr.mxu0 0.0
        %1850 = vmatpush2.msra.mxu0 %v1812
        %1851 = vmatprep.subr.mxu0 0.0
        %1852 = vmatpush2.msra.mxu0 %v1811
        %1853 = vmatprep.subr.mxu0 0.0
        %1854 = vmatpush2.msra.mxu0 %v1810
        %1855 = vmatprep.subr.mxu0 0.0
        %1856 = vmatpush2.msra.mxu0 %v1809
        %1857 = vmatprep.subr.mxu0 0.0
        %1858 = vmatpush2.msra.mxu0 %v1808
        %1859 = vmatprep.subr.mxu0 0.0
        %1860 = vmatpush2.msra.mxu0 %v1807
        %1861 = vmatprep.subr.mxu0 0.0
        %1862 = vmatpush2.msra.mxu0 %v1806
        %1863 = vmatprep.subr.mxu0 0.0
        %1864 = vmatpush2.msra.mxu0 %v1805
        %1865 = vmatprep.subr.mxu0 0.0
        %1866 = vmatpush2.msra.mxu0 %v1804
        %1867 = vmatprep.subr.mxu0 0.0
        %1868 = vmatpush2.msra.mxu0 %v1803
        %1869 = vmatprep.subr.mxu0 0.0
        %1870 = vmatpush2.msra.mxu0 %v1802
        %1871 = vmatprep.subr.mxu0 0.0
        %1872 = vmatpush2.msra.mxu0 %v1801
        %1873 = vmatprep.subr.mxu0 0.0
        %1874 = vmatpush2.msra.mxu0 %v1800
        %1875 = vmatprep.subr.mxu0 0.0
        %1876 = vmatpush2.msra.mxu0 %v1799
        %1877 = vmatprep.subr.mxu0 0.0
        %1878 = vmatpush2.msra.mxu0 %v1798
        %1879 = vmatprep.mubr.f32.mxu0 %v1781
        %1880 = vmatmul.mubr.f32.gmra.mxu0 %v1780
        %v1881 = vpop.f32.mrf.mxu0
        %v1882 = vadd.f32 %v1814, %v1881
        %v1883 = vpop.f32.mrf.mxu0
        %1884 = vdwg.mxu0
        %vm1885 = vcmp.gt.f32.partialorder %v1882, 0.0
        %v1886 = vmul.f32 %v1882, 0.01
        %v1887 = vsel %vm1885, %v1882, %v1886
        %v1888 = vld [vmem:[%s7] sm:$0xff]
        %v1889 = vld [vmem:[%s7 + $0x8] sm:$0xff]
        %v1890 = vld [vmem:[%s7 + $0x10] sm:$0xff]
        %v1891 = vld [vmem:[%s7 + $0x18] sm:$0xff]
        %v1892 = vld [vmem:[%s7 + $0x20] sm:$0xff]
        %v1893 = vld [vmem:[%s7 + $0x28] sm:$0xff]
        %v1894 = vld [vmem:[%s7 + $0x30] sm:$0xff]
        %v1895 = vld [vmem:[%s7 + $0x38] sm:$0xff]
        %v1896 = vld [vmem:[%s7 + $0x40] sm:$0xff]
        %v1897 = vld [vmem:[%s7 + $0x48] sm:$0xff]
        %v1898 = vld [vmem:[%s7 + $0x50] sm:$0xff]
        %v1899 = vld [vmem:[%s7 + $0x58] sm:$0xff]
        %v1900 = vld [vmem:[%s7 + $0x60] sm:$0xff]
        %v1901 = vld [vmem:[%s7 + $0x68] sm:$0xff]
        %v1902 = vld [vmem:[%s7 + $0x70] sm:$0xff]
        %v1903 = vld [vmem:[%s7 + $0x78] sm:$0xff]
        %v1904 = vld [vmem:[%s8] sm:$0x1]
        %1905 = vmatprep.subr.mxu0 0.0
        %1906 = vmatpush1.msra.mxu0 %v1903
        %1907 = vmatprep.subr.mxu0 0.0
        %1908 = vmatpush1.msra.mxu0 %v1902
        %1909 = vmatprep.subr.mxu0 0.0
        %1910 = vmatpush1.msra.mxu0 %v1901
        %1911 = vmatprep.subr.mxu0 0.0
        %1912 = vmatpush1.msra.mxu0 %v1900
        %1913 = vmatprep.subr.mxu0 0.0
        %1914 = vmatpush1.msra.mxu0 %v1899
        %1915 = vmatprep.subr.mxu0 0.0
        %1916 = vmatpush1.msra.mxu0 %v1898
        %1917 = vmatprep.subr.mxu0 0.0
        %1918 = vmatpush1.msra.mxu0 %v1897
        %1919 = vmatprep.subr.mxu0 0.0
        %1920 = vmatpush1.msra.mxu0 %v1896
        %1921 = vmatprep.subr.mxu0 0.0
        %1922 = vmatpush1.msra.mxu0 %v1895
        %1923 = vmatprep.subr.mxu0 0.0
        %1924 = vmatpush1.msra.mxu0 %v1894
        %1925 = vmatprep.subr.mxu0 0.0
        %1926 = vmatpush1.msra.mxu0 %v1893
        %1927 = vmatprep.subr.mxu0 0.0
        %1928 = vmatpush1.msra.mxu0 %v1892
        %1929 = vmatprep.subr.mxu0 0.0
        %1930 = vmatpush1.msra.mxu0 %v1891
        %1931 = vmatprep.subr.mxu0 0.0
        %1932 = vmatpush1.msra.mxu0 %v1890
        %1933 = vmatprep.subr.mxu0 0.0
        %1934 = vmatpush1.msra.mxu0 %v1889
        %1935 = vmatprep.subr.mxu0 0.0
        %1936 = vmatpush1.msra.mxu0 %v1888
        %1937 = vmatprep.subr.mxu0 0.0
        %1938 = vmatpush2.msra.mxu0 0.0
        %1939 = vmatprep.subr.mxu0 0.0
        %1940 = vmatpush2.msra.mxu0 0.0
        %1941 = vmatprep.subr.mxu0 0.0
        %1942 = vmatpush2.msra.mxu0 0.0
        %1943 = vmatprep.subr.mxu0 0.0
        %1944 = vmatpush2.msra.mxu0 0.0
        %1945 = vmatprep.subr.mxu0 0.0
        %1946 = vmatpush2.msra.mxu0 0.0
        %1947 = vmatprep.subr.mxu0 0.0
        %1948 = vmatpush2.msra.mxu0 0.0
        %1949 = vmatprep.subr.mxu0 0.0
        %1950 = vmatpush2.msra.mxu0 0.0
        %1951 = vmatprep.subr.mxu0 0.0
        %1952 = vmatpush2.msra.mxu0 0.0
        %1953 = vmatprep.subr.mxu0 0.0
        %1954 = vmatpush2.msra.mxu0 0.0
        %1955 = vmatprep.subr.mxu0 0.0
        %1956 = vmatpush2.msra.mxu0 0.0
        %1957 = vmatprep.subr.mxu0 0.0
        %1958 = vmatpush2.msra.mxu0 0.0
        %1959 = vmatprep.subr.mxu0 0.0
        %1960 = vmatpush2.msra.mxu0 0.0
        %1961 = vmatprep.subr.mxu0 0.0
        %1962 = vmatpush2.msra.mxu0 0.0
        %1963 = vmatprep.subr.mxu0 0.0
        %1964 = vmatpush2.msra.mxu0 0.0
        %1965 = vmatprep.subr.mxu0 0.0
        %1966 = vmatpush2.msra.mxu0 0.0
        %1967 = vmatprep.subr.mxu0 0.0
        %1968 = vmatpush2.msra.mxu0 0.0
        %1969 = vmatprep.mubr.f32.mxu0 0.0
        %1970 = vmatmul.mubr.f32.gmra.mxu0 %v1887
        %v1971 = vpop.f32.mrf.mxu0
        %v1972 = vadd.f32 %v1904, %v1971
        %v1973 = vpop.f32.mrf.mxu0
        %1974 = vdwg.mxu0
        %1975 = vst [vmem:[%s324] sm:$0x1] %v1972
        %s1976 = sand.u32 %s225, 1
        %s1977 = scalar_lea.sflag [#allocation3], %s1976
        %s1978 = sand.u32 %s225, 1
        %s1979 = scalar_lea.vmem [#allocation2], %s1978
        // Predicated region
        $region57: #{one_conv_forward.1} parent=55 // pred_check
          %p1980 = pneg %p235
        $region58: #{one_conv_forward.1} parent=55 // pred_check_branch
          %1982 = sbr.rel (%p1980) target = $region60
        $region59: #{one_conv_forward.1} parent=55 // pred_region
          %s1984 = ssub.s32 16, 16
          %1985 = vsyncadd %s1977, %s1984
          %s1986 = smul.addr %s23, 16
          %s1987 = scalar_lea.hbm %s9, %s1986
          %s1989 = sshll.u32 %s1979, 4
          %s1990 = int_to_ptr.vmem [resolvable:$true] %s1989
          %1992 = dma.vmem_to_hbm [thread:$0]  %s1990, 16, %s1987, %s1977
        $region60: #{one_conv_forward.1} parent=55 // pred_fallthru
          _
      $region56: #{one_conv_forward.1} parent=5 // pred_fallthru
        _
      %p1993 = scmp.le.s32.totalorder 2, %s18
      // Predicated region
      $region61: #{one_conv_forward.1} parent=5 // pred_check
        %p1994 = pneg %p1993
      $region62: #{one_conv_forward.1} parent=5 // pred_check_branch
        %1996 = sbr.rel (%p1994) target = $region64
      $region63: #{one_conv_forward.1} parent=5 // pred_region
        %s1997 = ssub.s32 %s18, 2
        // Predicated region
        $region65: #{one_conv_forward.1} parent=63 // pred_check
          %p1998 = pneg %p241
        $region66: #{one_conv_forward.1} parent=63 // pred_check_branch
          %2000 = sbr.rel (%p1998) target = $region68
        $region67: #{one_conv_forward.1} parent=63 // pred_region
          %s2001 = sand.u32 %s226, 1
          %s2002 = scalar_lea.sflag [#allocation3], %s2001
          %s2003 = sand.u32 %s226, 1
          %s2004 = scalar_lea.vmem [#allocation2], %s2003
          %2005 = dma.done %s2002, 16
        $region68: #{one_conv_forward.1} parent=63 // pred_fallthru
          _
      $region64: #{one_conv_forward.1} parent=5 // pred_fallthru
        _
    $region6: #{one_conv_forward.1} parent=1 // loop_footer
      %s22 = sadd.s32 1, %s18
    $region7: #{one_conv_forward.1} parent=1 // loop_footer_branch
      %17 = sbr.rel target = $region3
    $region8: #{one_conv_forward.1} parent=1 // loop_exit
      _
    %2006 = vsyncpa [#allocation3], 1
    %s2007 = scalar_lea.sflag [#allocation3], 1
    %2008 = vsyncpa %s2007, 1

</llo_original>
